<compile_context>
chip_gen: v6e
topology: v6e:2x2x1
jax: 0.10.0
libtpu: 0.0.40
codegen_flags: <defaults>
</compile_context>

<pallas_src>
import math

import jax
import jax.numpy as jnp
from jax import lax
from jax.experimental import pallas as pl
from jax.experimental.pallas import tpu as pltpu

# ---- model dims (small, consistent with the module) ----
B = 2        # batch
S = 8        # sequence length
D = 32       # d_model
H = 4        # attention heads
DK = D // H  # per-head dim
DFF = 64     # feed-forward hidden
EPS = 1e-5   # LayerNorm eps (nn.LayerNorm default)
BS = B * S

# packed parameter buffer layout (rows x 128 lanes, f32):
#   [0:D,       0:3D ] = [Wq | Wk | Wv]      (32, 96)
#   [0:D,      3D:4D ] = Wo                  (32, 32)
#   [D:D+DFF,   0:D  ] = W2                  (64, 32)
#   [D+DFF:RB,  0:DFF] = W1                  (32, 64)
#   [RB,        0:3D ] = [bq | bk | bv]
#   [RB+1] = [g1 | be1 | g2 | be2]
#   [RB+2] = [bo | bf2 | bf1]
RB = 2 * D + DFF           # = 128, first bias/vector row
P_ROWS_PAD = 136           # rows used = RB + 3 = 131, padded to a multiple of 8
P_COLS = 128               # lane-dense


def _layer_norm(h, gamma, beta):
    mu = jnp.mean(h, axis=-1, keepdims=True)
    var = jnp.mean((h - mu) ** 2, axis=-1, keepdims=True)
    return (h - mu) * lax.rsqrt(var + EPS) * gamma + beta


def encoder_sublayer_kernel(x_ref, bias_ref, p_ref, o_ref):
    # ---- static views of the single packed parameter buffer (cheap slice loads) ----
    wqkv = p_ref[0:D, 0:3 * D]                       # (32, 96)
    wo = p_ref[0:D, 3 * D:4 * D]                     # (32, 32)
    w2 = p_ref[D:D + DFF, 0:D]                       # (64, 32)
    w1 = p_ref[D + DFF:RB, 0:DFF]                    # (32, 64)
    bqkv = p_ref[RB:RB + 1, 0:3 * D]                 # (1, 96)
    g1 = p_ref[RB + 1:RB + 2, 0:D]
    be1 = p_ref[RB + 1:RB + 2, D:2 * D]
    g2 = p_ref[RB + 1:RB + 2, 2 * D:3 * D]
    be2 = p_ref[RB + 1:RB + 2, 3 * D:4 * D]
    bo = p_ref[RB + 2:RB + 3, 0:D]
    bf2 = p_ref[RB + 2:RB + 3, D:2 * D]
    bf1 = p_ref[RB + 2:RB + 3, 2 * D:2 * D + DFF]    # (1, 64)

    x = x_ref[...]                                   # (B*S, D) -- batch folded into rows
    attn_bias = bias_ref[...]                        # (B*S, B*S) additive 0 / -1e9 mask

    # TODO(synk): dropout inside ResidualConnection is identity at inference; not modeled.

    # ---------- sublayer 1: pre-LN multi-head self-attention + residual ----------
    xn = _layer_norm(x, g1, be1)
    # single lane-dense MXU push producing Q|K|V for every head and both batches
    qkv = jnp.dot(xn, wqkv, preferred_element_type=jnp.float32) + bqkv       # (16, 96)
    q = qkv[:, 0:D] * (1.0 / math.sqrt(DK))          # fold 1/sqrt(dk) into q once
    k = qkv[:, D:2 * D]
    v = qkv[:, 2 * D:3 * D]

    # per-head scores / softmax / ctx on resident lane slices of qkv; cross-batch
    # pairs and masked keys are killed by the additive bias (exp underflows to 0)
    ctx_heads = []
    for h in range(H):
        hs = slice(h * DK, (h + 1) * DK)
        s = jnp.einsum('qd,kd->qk', q[:, hs], k[:, hs],
                       preferred_element_type=jnp.float32) + attn_bias       # (16, 16)
        s = s - jnp.max(s, axis=-1, keepdims=True)
        p = jnp.exp(s)
        p = p * pl.reciprocal(jnp.sum(p, axis=-1, keepdims=True), approx=True)
        ctx_heads.append(jnp.dot(p, v[:, hs], preferred_element_type=jnp.float32))

    # head concat folded into ONE (16,32)@(32,32) output-projection matmul
    ctx = jnp.concatenate(ctx_heads, axis=-1)                                # (16, 32)
    x1 = x + jnp.dot(ctx, wo, preferred_element_type=jnp.float32) + bo

    # ---------- sublayer 2: pre-LN feed-forward + residual ----------
    x1n = _layer_norm(x1, g2, be2)
    hdn = jnp.maximum(jnp.dot(x1n, w1, preferred_element_type=jnp.float32) + bf1, 0.0)
    ff = jnp.dot(hdn, w2, preferred_element_type=jnp.float32) + bf2

    # (16, 32) store: 2 masked vreg stores for a 2 KB result; widening to (2, 256)
    # would require a minor-dim lane relayout that costs more than it removes here.
    o_ref[...] = (x1 + ff).astype(o_ref.dtype)


def encoder_sublayer(x, src_mask, params):
    (wq, bq, wk, bk, wv, bv, wo, bo, g1, be1, w1, bf1, w2, bf2, g2, be2) = params

    # ---- one packed, 128-lane-wide parameter buffer (3 input DMAs total) ----
    p = jnp.zeros((P_ROWS_PAD, P_COLS), jnp.float32)
    p = p.at[0:D, 0:3 * D].set(jnp.concatenate([wq, wk, wv], axis=1))
    p = p.at[0:D, 3 * D:4 * D].set(wo)
    p = p.at[D:D + DFF, 0:D].set(w2)
    p = p.at[D + DFF:RB, 0:DFF].set(w1)
    p = p.at[RB, 0:3 * D].set(jnp.concatenate([bq[0], bk[0], bv[0]]))
    p = p.at[RB + 1, 0:D].set(g1[0])
    p = p.at[RB + 1, D:2 * D].set(be1[0])
    p = p.at[RB + 1, 2 * D:3 * D].set(g2[0])
    p = p.at[RB + 1, 3 * D:4 * D].set(be2[0])
    p = p.at[RB + 2, 0:D].set(bo[0])
    p = p.at[RB + 2, D:2 * D].set(bf2[0])
    p = p.at[RB + 2, 2 * D:2 * D + DFF].set(bf1[0])

    # ---- additive attention bias: folds src_mask AND the batch block structure ----
    key_valid = (src_mask[:, 0, :] != 0).reshape(BS)
    rows = jnp.arange(BS) // S
    same_batch = rows[:, None] == rows[None, :]
    attn_bias = jnp.where(same_batch & key_valid[None, :], 0.0, -1e9).astype(jnp.float32)

    vmem = pl.BlockSpec(memory_space=pltpu.MemorySpace.VMEM)
    out = pl.pallas_call(
        encoder_sublayer_kernel,
        out_shape=jax.ShapeDtypeStruct((BS, D), x.dtype),
        in_specs=[vmem, vmem, vmem],
        out_specs=vmem,
    )(x.reshape(BS, D), attn_bias, p)
    return out.reshape(B, S, D)


def reference(x, src_mask, params):
    (wq, bq, wk, bk, wv, bv, wo, bo, g1, be1, w1, bf1, w2, bf2, g2, be2) = params

    def ln(h, g, b):
        mu = jnp.mean(h, axis=-1, keepdims=True)
        var = jnp.mean((h - mu) ** 2, axis=-1, keepdims=True)
        return (h - mu) / jnp.sqrt(var + EPS) * g + b

    xn = ln(x, g1, be1)
    q = xn @ wq + bq
    k = xn @ wk + bk
    v = xn @ wv + bv
    q = q.reshape(B, S, H, DK).transpose(0, 2, 1, 3)
    k = k.reshape(B, S, H, DK).transpose(0, 2, 1, 3)
    v = v.reshape(B, S, H, DK).transpose(0, 2, 1, 3)
    s = jnp.einsum("bhqd,bhkd->bhqk", q, k) / math.sqrt(DK)
    s = jnp.where(src_mask[:, None, :, :] == 0, -1e9, s)
    p = jax.nn.softmax(s, axis=-1)
    attn = jnp.einsum("bhqk,bhkd->bhqd", p, v).transpose(0, 2, 1, 3).reshape(B, S, D)
    x1 = x + (attn @ wo + bo)
    x1n = ln(x1, g2, be2)
    ff = jnp.maximum(x1n @ w1 + bf1, 0.0) @ w2 + bf2
    return x1 + ff


def make_params(key):
    ks = jax.random.split(key, 8)

    def lin(k, fan_in, fan_out):
        bound = 1.0 / math.sqrt(fan_in)
        kw, kb = jax.random.split(k)
        w = jax.random.uniform(kw, (fan_in, fan_out), jnp.float32, -bound, bound)
        b = jax.random.uniform(kb, (1, fan_out), jnp.float32, -bound, bound)
        return w, b

    wq, bq = lin(ks[0], D, D)
    wk, bk = lin(ks[1], D, D)
    wv, bv = lin(ks[2], D, D)
    wo, bo = lin(ks[3], D, D)
    w1, bf1 = lin(ks[4], D, DFF)
    w2, bf2 = lin(ks[5], DFF, D)
    g1 = jnp.ones((1, D), jnp.float32)
    be1 = jnp.zeros((1, D), jnp.float32)
    g2 = jnp.ones((1, D), jnp.float32)
    be2 = jnp.zeros((1, D), jnp.float32)
    return (wq, bq, wk, bk, wv, bv, wo, bo, g1, be1, w1, bf1, w2, bf2, g2, be2)


if __name__ == "__main__":
    key = jax.random.PRNGKey(0)
    kx, kp = jax.random.split(key)
    x = jax.random.normal(kx, (B, S, D), jnp.float32)
    # src_mask: [B, 1, S]; mask out the last two key positions for batch 1.
    src_mask = jnp.ones((B, 1, S), jnp.float32)
    src_mask = src_mask.at[1, 0, 6:].set(0.0)
    params = make_params(kp)

    out = jax.block_until_ready(encoder_sublayer(x, src_mask, params))
    ref = reference(x, src_mask, params)
    assert out.shape == (B, S, D)
    # 5e-3 leaves headroom for the approximate EUP reciprocal in the softmax denominator.
    assert jnp.allclose(out, ref, atol=5e-3, rtol=5e-3), "mismatch vs JAX reference"
    print("KERNEL_OK")
</pallas_src>

<mosaic_0001>
module attributes {stable_mosaic.version = 11 : i64} {
  func.func @encoder_sublayer_kernel(%arg0: memref<16x32xf32, #tpu.memory_space<vmem>>, %arg1: memref<16x16xf32, #tpu.memory_space<vmem>>, %arg2: memref<136x128xf32, #tpu.memory_space<vmem>>, %arg3: memref<16x32xf32, #tpu.memory_space<vmem>>) attributes {dimension_semantics = [], scalar_prefetch = 0 : i64, scratch_operands = 0 : i64, tpu.core_type = #tpu.core_type<tc>} {
    %c0 = arith.constant 0 : index
    %c0_0 = arith.constant 0 : index
    %0 = vector.load %arg2[%c0, %c0_0] : memref<136x128xf32, #tpu.memory_space<vmem>>, vector<32x96xf32>
    %c0_1 = arith.constant 0 : index
    %c96 = arith.constant 96 : index
    %1 = vector.load %arg2[%c0_1, %c96] : memref<136x128xf32, #tpu.memory_space<vmem>>, vector<32x32xf32>
    %c32 = arith.constant 32 : index
    %c0_2 = arith.constant 0 : index
    %2 = vector.load %arg2[%c32, %c0_2] : memref<136x128xf32, #tpu.memory_space<vmem>>, vector<64x32xf32>
    %c96_3 = arith.constant 96 : index
    %c0_4 = arith.constant 0 : index
    %3 = vector.load %arg2[%c96_3, %c0_4] : memref<136x128xf32, #tpu.memory_space<vmem>>, vector<32x64xf32>
    %c128 = arith.constant 128 : index
    %c0_5 = arith.constant 0 : index
    %4 = vector.load %arg2[%c128, %c0_5] : memref<136x128xf32, #tpu.memory_space<vmem>>, vector<1x96xf32>
    %c129 = arith.constant 129 : index
    %c0_6 = arith.constant 0 : index
    %5 = vector.load %arg2[%c129, %c0_6] : memref<136x128xf32, #tpu.memory_space<vmem>>, vector<1x32xf32>
    %c129_7 = arith.constant 129 : index
    %c32_8 = arith.constant 32 : index
    %6 = vector.load %arg2[%c129_7, %c32_8] : memref<136x128xf32, #tpu.memory_space<vmem>>, vector<1x32xf32>
    %c129_9 = arith.constant 129 : index
    %c64 = arith.constant 64 : index
    %7 = vector.load %arg2[%c129_9, %c64] : memref<136x128xf32, #tpu.memory_space<vmem>>, vector<1x32xf32>
    %c129_10 = arith.constant 129 : index
    %c96_11 = arith.constant 96 : index
    %8 = vector.load %arg2[%c129_10, %c96_11] : memref<136x128xf32, #tpu.memory_space<vmem>>, vector<1x32xf32>
    %c130 = arith.constant 130 : index
    %c0_12 = arith.constant 0 : index
    %9 = vector.load %arg2[%c130, %c0_12] : memref<136x128xf32, #tpu.memory_space<vmem>>, vector<1x32xf32>
    %c130_13 = arith.constant 130 : index
    %c32_14 = arith.constant 32 : index
    %10 = vector.load %arg2[%c130_13, %c32_14] : memref<136x128xf32, #tpu.memory_space<vmem>>, vector<1x32xf32>
    %c130_15 = arith.constant 130 : index
    %c64_16 = arith.constant 64 : index
    %11 = vector.load %arg2[%c130_15, %c64_16] : memref<136x128xf32, #tpu.memory_space<vmem>>, vector<1x64xf32>
    %c0_17 = arith.constant 0 : index
    %c0_18 = arith.constant 0 : index
    %12 = vector.load %arg0[%c0_17, %c0_18] : memref<16x32xf32, #tpu.memory_space<vmem>>, vector<16x32xf32>
    %c0_19 = arith.constant 0 : index
    %c0_20 = arith.constant 0 : index
    %13 = vector.load %arg1[%c0_19, %c0_20] : memref<16x16xf32, #tpu.memory_space<vmem>>, vector<16x16xf32>
    %cst = arith.constant dense<0.000000e+00> : vector<16xf32>
    %14 = vector.multi_reduction <add>, %12, %cst [1] : vector<16x32xf32> to vector<16xf32>
    %15 = vector.shape_cast %14 : vector<16xf32> to vector<16x1xf32>
    %cst_21 = arith.constant 3.200000e+01 : f32
    %16 = vector.broadcast %cst_21 : f32 to vector<16x1xf32>
    %17 = arith.divf %15, %16 : vector<16x1xf32>
    %18 = vector.broadcast %17 : vector<16x1xf32> to vector<16x32xf32>
    %19 = arith.subf %12, %18 : vector<16x32xf32>
    %20 = arith.mulf %19, %19 : vector<16x32xf32>
    %cst_22 = arith.constant dense<0.000000e+00> : vector<16xf32>
    %21 = vector.multi_reduction <add>, %20, %cst_22 [1] : vector<16x32xf32> to vector<16xf32>
    %22 = vector.shape_cast %21 : vector<16xf32> to vector<16x1xf32>
    %cst_23 = arith.constant 3.200000e+01 : f32
    %23 = vector.broadcast %cst_23 : f32 to vector<16x1xf32>
    %24 = arith.divf %22, %23 : vector<16x1xf32>
    %25 = vector.broadcast %17 : vector<16x1xf32> to vector<16x32xf32>
    %26 = arith.subf %12, %25 : vector<16x32xf32>
    %cst_24 = arith.constant 9.99999974E-6 : f32
    %27 = vector.broadcast %cst_24 : f32 to vector<16x1xf32>
    %28 = arith.addf %24, %27 : vector<16x1xf32>
    %29 = math.rsqrt %28 : vector<16x1xf32>
    %30 = vector.broadcast %29 : vector<16x1xf32> to vector<16x32xf32>
    %31 = arith.mulf %26, %30 : vector<16x32xf32>
    %32 = vector.broadcast %5 : vector<1x32xf32> to vector<16x32xf32>
    %33 = arith.mulf %31, %32 : vector<16x32xf32>
    %34 = vector.broadcast %6 : vector<1x32xf32> to vector<16x32xf32>
    %35 = arith.addf %33, %34 : vector<16x32xf32>
    %cst_25 = arith.constant dense<0.000000e+00> : vector<16x96xf32>
    %36 = tpu.matmul %35, %0, %cst_25 {dimension_numbers = #tpu.dot_dimension_numbers<[1], [0], [0], [1], [0, 0, 1, 1], [], []>} : vector<16x32xf32>, vector<32x96xf32>, vector<16x96xf32> -> vector<16x96xf32>
    %37 = vector.broadcast %4 : vector<1x96xf32> to vector<16x96xf32>
    %38 = arith.addf %36, %37 : vector<16x96xf32>
    %39 = vector.extract_strided_slice %38 {offsets = [0, 0], sizes = [16, 32], strides = [1, 1]} : vector<16x96xf32> to vector<16x32xf32>
    %cst_26 = arith.constant 0.353553385 : f32
    %40 = vector.broadcast %cst_26 : f32 to vector<16x32xf32>
    %41 = arith.mulf %39, %40 : vector<16x32xf32>
    %42 = vector.extract_strided_slice %38 {offsets = [0, 32], sizes = [16, 32], strides = [1, 1]} : vector<16x96xf32> to vector<16x32xf32>
    %43 = vector.extract_strided_slice %38 {offsets = [0, 64], sizes = [16, 32], strides = [1, 1]} : vector<16x96xf32> to vector<16x32xf32>
    %44 = vector.extract_strided_slice %41 {offsets = [0, 0], sizes = [16, 8], strides = [1, 1]} : vector<16x32xf32> to vector<16x8xf32>
    %45 = vector.extract_strided_slice %42 {offsets = [0, 0], sizes = [16, 8], strides = [1, 1]} : vector<16x32xf32> to vector<16x8xf32>
    "tpu.trace_start"() <{level = 10 : i32, message = "qd,kd->qk"}> : () -> ()
    %cst_27 = arith.constant dense<0.000000e+00> : vector<16x16xf32>
    %46 = tpu.matmul %44, %45, %cst_27 {dimension_numbers = #tpu.dot_dimension_numbers<[1], [1], [0], [0], [0, 0, 1, 0], [], []>} : vector<16x8xf32>, vector<16x8xf32>, vector<16x16xf32> -> vector<16x16xf32>
    "tpu.trace_stop"() : () -> ()
    %47 = arith.addf %46, %13 : vector<16x16xf32>
    %cst_28 = arith.constant dense<0xFF800000> : vector<16xf32>
    %48 = vector.multi_reduction <maximumf>, %47, %cst_28 [1] : vector<16x16xf32> to vector<16xf32>
    %49 = vector.shape_cast %48 : vector<16xf32> to vector<16x1xf32>
    %50 = vector.broadcast %49 : vector<16x1xf32> to vector<16x16xf32>
    %51 = arith.subf %47, %50 : vector<16x16xf32>
    %52 = math.exp %51 : vector<16x16xf32>
    %cst_29 = arith.constant dense<0.000000e+00> : vector<16xf32>
    %53 = vector.multi_reduction <add>, %52, %cst_29 [1] : vector<16x16xf32> to vector<16xf32>
    %54 = vector.shape_cast %53 : vector<16xf32> to vector<16x1xf32>
    %55 = tpu.reciprocal %54 {approx = true} : vector<16x1xf32> -> vector<16x1xf32>
    %56 = vector.broadcast %55 : vector<16x1xf32> to vector<16x16xf32>
    %57 = arith.mulf %52, %56 : vector<16x16xf32>
    %58 = vector.extract_strided_slice %43 {offsets = [0, 0], sizes = [16, 8], strides = [1, 1]} : vector<16x32xf32> to vector<16x8xf32>
    %cst_30 = arith.constant dense<0.000000e+00> : vector<16x8xf32>
    %59 = tpu.matmul %57, %58, %cst_30 {dimension_numbers = #tpu.dot_dimension_numbers<[1], [0], [0], [1], [0, 0, 1, 1], [], []>} : vector<16x16xf32>, vector<16x8xf32>, vector<16x8xf32> -> vector<16x8xf32>
    %60 = vector.extract_strided_slice %41 {offsets = [0, 8], sizes = [16, 8], strides = [1, 1]} : vector<16x32xf32> to vector<16x8xf32>
    %61 = vector.extract_strided_slice %42 {offsets = [0, 8], sizes = [16, 8], strides = [1, 1]} : vector<16x32xf32> to vector<16x8xf32>
    "tpu.trace_start"() <{level = 10 : i32, message = "qd,kd->qk"}> : () -> ()
    %cst_31 = arith.constant dense<0.000000e+00> : vector<16x16xf32>
    %62 = tpu.matmul %60, %61, %cst_31 {dimension_numbers = #tpu.dot_dimension_numbers<[1], [1], [0], [0], [0, 0, 1, 0], [], []>} : vector<16x8xf32>, vector<16x8xf32>, vector<16x16xf32> -> vector<16x16xf32>
    "tpu.trace_stop"() : () -> ()
    %63 = arith.addf %62, %13 : vector<16x16xf32>
    %cst_32 = arith.constant dense<0xFF800000> : vector<16xf32>
    %64 = vector.multi_reduction <maximumf>, %63, %cst_32 [1] : vector<16x16xf32> to vector<16xf32>
    %65 = vector.shape_cast %64 : vector<16xf32> to vector<16x1xf32>
    %66 = vector.broadcast %65 : vector<16x1xf32> to vector<16x16xf32>
    %67 = arith.subf %63, %66 : vector<16x16xf32>
    %68 = math.exp %67 : vector<16x16xf32>
    %cst_33 = arith.constant dense<0.000000e+00> : vector<16xf32>
    %69 = vector.multi_reduction <add>, %68, %cst_33 [1] : vector<16x16xf32> to vector<16xf32>
    %70 = vector.shape_cast %69 : vector<16xf32> to vector<16x1xf32>
    %71 = tpu.reciprocal %70 {approx = true} : vector<16x1xf32> -> vector<16x1xf32>
    %72 = vector.broadcast %71 : vector<16x1xf32> to vector<16x16xf32>
    %73 = arith.mulf %68, %72 : vector<16x16xf32>
    %74 = vector.extract_strided_slice %43 {offsets = [0, 8], sizes = [16, 8], strides = [1, 1]} : vector<16x32xf32> to vector<16x8xf32>
    %cst_34 = arith.constant dense<0.000000e+00> : vector<16x8xf32>
    %75 = tpu.matmul %73, %74, %cst_34 {dimension_numbers = #tpu.dot_dimension_numbers<[1], [0], [0], [1], [0, 0, 1, 1], [], []>} : vector<16x16xf32>, vector<16x8xf32>, vector<16x8xf32> -> vector<16x8xf32>
    %76 = vector.extract_strided_slice %41 {offsets = [0, 16], sizes = [16, 8], strides = [1, 1]} : vector<16x32xf32> to vector<16x8xf32>
    %77 = vector.extract_strided_slice %42 {offsets = [0, 16], sizes = [16, 8], strides = [1, 1]} : vector<16x32xf32> to vector<16x8xf32>
    "tpu.trace_start"() <{level = 10 : i32, message = "qd,kd->qk"}> : () -> ()
    %cst_35 = arith.constant dense<0.000000e+00> : vector<16x16xf32>
    %78 = tpu.matmul %76, %77, %cst_35 {dimension_numbers = #tpu.dot_dimension_numbers<[1], [1], [0], [0], [0, 0, 1, 0], [], []>} : vector<16x8xf32>, vector<16x8xf32>, vector<16x16xf32> -> vector<16x16xf32>
    "tpu.trace_stop"() : () -> ()
    %79 = arith.addf %78, %13 : vector<16x16xf32>
    %cst_36 = arith.constant dense<0xFF800000> : vector<16xf32>
    %80 = vector.multi_reduction <maximumf>, %79, %cst_36 [1] : vector<16x16xf32> to vector<16xf32>
    %81 = vector.shape_cast %80 : vector<16xf32> to vector<16x1xf32>
    %82 = vector.broadcast %81 : vector<16x1xf32> to vector<16x16xf32>
    %83 = arith.subf %79, %82 : vector<16x16xf32>
    %84 = math.exp %83 : vector<16x16xf32>
    %cst_37 = arith.constant dense<0.000000e+00> : vector<16xf32>
    %85 = vector.multi_reduction <add>, %84, %cst_37 [1] : vector<16x16xf32> to vector<16xf32>
    %86 = vector.shape_cast %85 : vector<16xf32> to vector<16x1xf32>
    %87 = tpu.reciprocal %86 {approx = true} : vector<16x1xf32> -> vector<16x1xf32>
    %88 = vector.broadcast %87 : vector<16x1xf32> to vector<16x16xf32>
    %89 = arith.mulf %84, %88 : vector<16x16xf32>
    %90 = vector.extract_strided_slice %43 {offsets = [0, 16], sizes = [16, 8], strides = [1, 1]} : vector<16x32xf32> to vector<16x8xf32>
    %cst_38 = arith.constant dense<0.000000e+00> : vector<16x8xf32>
    %91 = tpu.matmul %89, %90, %cst_38 {dimension_numbers = #tpu.dot_dimension_numbers<[1], [0], [0], [1], [0, 0, 1, 1], [], []>} : vector<16x16xf32>, vector<16x8xf32>, vector<16x8xf32> -> vector<16x8xf32>
    %92 = vector.extract_strided_slice %41 {offsets = [0, 24], sizes = [16, 8], strides = [1, 1]} : vector<16x32xf32> to vector<16x8xf32>
    %93 = vector.extract_strided_slice %42 {offsets = [0, 24], sizes = [16, 8], strides = [1, 1]} : vector<16x32xf32> to vector<16x8xf32>
    "tpu.trace_start"() <{level = 10 : i32, message = "qd,kd->qk"}> : () -> ()
    %cst_39 = arith.constant dense<0.000000e+00> : vector<16x16xf32>
    %94 = tpu.matmul %92, %93, %cst_39 {dimension_numbers = #tpu.dot_dimension_numbers<[1], [1], [0], [0], [0, 0, 1, 0], [], []>} : vector<16x8xf32>, vector<16x8xf32>, vector<16x16xf32> -> vector<16x16xf32>
    "tpu.trace_stop"() : () -> ()
    %95 = arith.addf %94, %13 : vector<16x16xf32>
    %cst_40 = arith.constant dense<0xFF800000> : vector<16xf32>
    %96 = vector.multi_reduction <maximumf>, %95, %cst_40 [1] : vector<16x16xf32> to vector<16xf32>
    %97 = vector.shape_cast %96 : vector<16xf32> to vector<16x1xf32>
    %98 = vector.broadcast %97 : vector<16x1xf32> to vector<16x16xf32>
    %99 = arith.subf %95, %98 : vector<16x16xf32>
    %100 = math.exp %99 : vector<16x16xf32>
    %cst_41 = arith.constant dense<0.000000e+00> : vector<16xf32>
    %101 = vector.multi_reduction <add>, %100, %cst_41 [1] : vector<16x16xf32> to vector<16xf32>
    %102 = vector.shape_cast %101 : vector<16xf32> to vector<16x1xf32>
    %103 = tpu.reciprocal %102 {approx = true} : vector<16x1xf32> -> vector<16x1xf32>
    %104 = vector.broadcast %103 : vector<16x1xf32> to vector<16x16xf32>
    %105 = arith.mulf %100, %104 : vector<16x16xf32>
    %106 = vector.extract_strided_slice %43 {offsets = [0, 24], sizes = [16, 8], strides = [1, 1]} : vector<16x32xf32> to vector<16x8xf32>
    %cst_42 = arith.constant dense<0.000000e+00> : vector<16x8xf32>
    %107 = tpu.matmul %105, %106, %cst_42 {dimension_numbers = #tpu.dot_dimension_numbers<[1], [0], [0], [1], [0, 0, 1, 1], [], []>} : vector<16x16xf32>, vector<16x8xf32>, vector<16x8xf32> -> vector<16x8xf32>
    %108 = tpu.concatenate %59, %75, %91, %107 in 1 : vector<16x8xf32>, vector<16x8xf32>, vector<16x8xf32>, vector<16x8xf32> -> vector<16x32xf32>
    %cst_43 = arith.constant dense<0.000000e+00> : vector<16x32xf32>
    %109 = tpu.matmul %108, %1, %cst_43 {dimension_numbers = #tpu.dot_dimension_numbers<[1], [0], [0], [1], [0, 0, 1, 1], [], []>} : vector<16x32xf32>, vector<32x32xf32>, vector<16x32xf32> -> vector<16x32xf32>
    %110 = arith.addf %12, %109 : vector<16x32xf32>
    %111 = vector.broadcast %9 : vector<1x32xf32> to vector<16x32xf32>
    %112 = arith.addf %110, %111 : vector<16x32xf32>
    %cst_44 = arith.constant dense<0.000000e+00> : vector<16xf32>
    %113 = vector.multi_reduction <add>, %112, %cst_44 [1] : vector<16x32xf32> to vector<16xf32>
    %114 = vector.shape_cast %113 : vector<16xf32> to vector<16x1xf32>
    %cst_45 = arith.constant 3.200000e+01 : f32
    %115 = vector.broadcast %cst_45 : f32 to vector<16x1xf32>
    %116 = arith.divf %114, %115 : vector<16x1xf32>
    %117 = vector.broadcast %116 : vector<16x1xf32> to vector<16x32xf32>
    %118 = arith.subf %112, %117 : vector<16x32xf32>
    %119 = arith.mulf %118, %118 : vector<16x32xf32>
    %cst_46 = arith.constant dense<0.000000e+00> : vector<16xf32>
    %120 = vector.multi_reduction <add>, %119, %cst_46 [1] : vector<16x32xf32> to vector<16xf32>
    %121 = vector.shape_cast %120 : vector<16xf32> to vector<16x1xf32>
    %cst_47 = arith.constant 3.200000e+01 : f32
    %122 = vector.broadcast %cst_47 : f32 to vector<16x1xf32>
    %123 = arith.divf %121, %122 : vector<16x1xf32>
    %124 = vector.broadcast %116 : vector<16x1xf32> to vector<16x32xf32>
    %125 = arith.subf %112, %124 : vector<16x32xf32>
    %cst_48 = arith.constant 9.99999974E-6 : f32
    %126 = vector.broadcast %cst_48 : f32 to vector<16x1xf32>
    %127 = arith.addf %123, %126 : vector<16x1xf32>
    %128 = math.rsqrt %127 : vector<16x1xf32>
    %129 = vector.broadcast %128 : vector<16x1xf32> to vector<16x32xf32>
    %130 = arith.mulf %125, %129 : vector<16x32xf32>
    %131 = vector.broadcast %7 : vector<1x32xf32> to vector<16x32xf32>
    %132 = arith.mulf %130, %131 : vector<16x32xf32>
    %133 = vector.broadcast %8 : vector<1x32xf32> to vector<16x32xf32>
    %134 = arith.addf %132, %133 : vector<16x32xf32>
    %cst_49 = arith.constant dense<0.000000e+00> : vector<16x64xf32>
    %135 = tpu.matmul %134, %3, %cst_49 {dimension_numbers = #tpu.dot_dimension_numbers<[1], [0], [0], [1], [0, 0, 1, 1], [], []>} : vector<16x32xf32>, vector<32x64xf32>, vector<16x64xf32> -> vector<16x64xf32>
    %136 = vector.broadcast %11 : vector<1x64xf32> to vector<16x64xf32>
    %137 = arith.addf %135, %136 : vector<16x64xf32>
    %cst_50 = arith.constant 0.000000e+00 : f32
    %138 = vector.broadcast %cst_50 : f32 to vector<16x64xf32>
    %139 = arith.maximumf %137, %138 : vector<16x64xf32>
    %cst_51 = arith.constant dense<0.000000e+00> : vector<16x32xf32>
    %140 = tpu.matmul %139, %2, %cst_51 {dimension_numbers = #tpu.dot_dimension_numbers<[1], [0], [0], [1], [0, 0, 1, 1], [], []>} : vector<16x64xf32>, vector<64x32xf32>, vector<16x32xf32> -> vector<16x32xf32>
    %141 = vector.broadcast %10 : vector<1x32xf32> to vector<16x32xf32>
    %142 = arith.addf %140, %141 : vector<16x32xf32>
    %143 = arith.addf %112, %142 : vector<16x32xf32>
    %c0_52 = arith.constant 0 : index
    %c0_53 = arith.constant 0 : index
    %144 = vector.load %arg3[%c0_52, %c0_53] : memref<16x32xf32, #tpu.memory_space<vmem>>, vector<16x32xf32>
    tpu.vector_store %arg3[%c0_52, %c0_53], %143 {strides = array<i32>} : memref<16x32xf32, #tpu.memory_space<vmem>>, vector<16x32xf32>,
    return
  }
}

</mosaic_0001>

<llo_original>
// kernel: tpu_custom_call.1
$region0: #{tpu_custom_call.1}
  #allocation0 [shape = 'u32[]', space=smem, size = 0x4, offset = 0x4, fixed_abs, tag = 'smem constant byte address 0x4 - core index']
  #allocation1 [shape = 'u32[144,128]{1,0:T(1,128)}', space=vmem, size = 0x12000, scoped, tag = 'internal scratch']
  %s0 = inlined_call_operand.hbm [shape: f32[16,32], index: 0, kind: input, shape index: {}]
  %s1 = inlined_call_operand.hbm [shape: f32[16,16], index: 1, kind: input, shape index: {}]
  %s2 = inlined_call_operand.hbm [shape: f32[136,128], index: 2, kind: input, shape index: {}]
  %s3 = inlined_call_operand.hbm [shape: f32[16,32], index: 3, kind: output, shape index: {}]
  %s4 = sld [smem:[#allocation0]]
  $region34: #{tpu_custom_call.1} parent=0
    _
  %s6 = ssub.s32 1, %s4
  %s7 = scalar_select 0, %s6, %s4
  $region1: #{tpu_custom_call.1} parent=0
    #allocation2 [shape = 'u8[8192]{0}', space=vmem, size = 0x2000, scoped, tag = 'input window, operand 0, single buffered']
    #allocation3 [shape = 's32[1]{0}', space=sflag, size = 0x4, scoped, tag = 'scoped memory for tpu_custom_call.1']
    #allocation4 [shape = 's32[1]{0}', space=sflag, size = 0x4, scoped, tag = 'scoped memory for tpu_custom_call.1']
    #allocation5 [shape = 'u8[8192]{0}', space=vmem, size = 0x2000, scoped, tag = 'input window, operand 1, single buffered']
    #allocation6 [shape = 's32[1]{0}', space=sflag, size = 0x4, scoped, tag = 'scoped memory for tpu_custom_call.1']
    #allocation7 [shape = 'u8[69632]{0}', space=vmem, size = 0x11000, scoped, tag = 'input window, operand 2, single buffered']
    #allocation8 [shape = 'u8[8192]{0}', space=vmem, size = 0x2000, scoped, tag = 'output window, operand 0, single buffered']
    %8 = vsyncpa [#allocation3], 0
    %9 = vsyncpa [#allocation6], 0
    %10 = vsyncpa [#allocation4], 0
    // Predicated region
    $region2: #{tpu_custom_call.1} parent=1 // pred_check
      _
    $region3: #{tpu_custom_call.1} parent=1 // pred_check_branch
      %12 = sbr.rel (0) target = $region5
    $region4: #{tpu_custom_call.1} parent=1 // pred_region
      %s14 = ssub.s32 256, 256
      %15 = vsyncadd [#allocation3], %s14
      %s16 = sshll.u32 [#allocation2], 4
      %s17 = int_to_ptr.vmem [resolvable:$true] %s16
      %22 = dma.hbm_to_vmem [thread:$0]  %s0, 256, %s17, [#allocation3], 128, 128, 8
    $region5: #{tpu_custom_call.1} parent=1 // pred_fallthru
      _
    // Predicated region
    $region6: #{tpu_custom_call.1} parent=1 // pred_check
      _
    $region7: #{tpu_custom_call.1} parent=1 // pred_check_branch
      %24 = sbr.rel (0) target = $region9
    $region8: #{tpu_custom_call.1} parent=1 // pred_region
      %s26 = ssub.s32 256, 256
      %27 = vsyncadd [#allocation6], %s26
      %s28 = sshll.u32 [#allocation5], 4
      %s29 = int_to_ptr.vmem [resolvable:$true] %s28
      %34 = dma.hbm_to_vmem [thread:$0]  %s1, 256, %s29, [#allocation6], 128, 128, 8
    $region9: #{tpu_custom_call.1} parent=1 // pred_fallthru
      _
    // Predicated region
    $region10: #{tpu_custom_call.1} parent=1 // pred_check
      _
    $region11: #{tpu_custom_call.1} parent=1 // pred_check_branch
      %36 = sbr.rel (0) target = $region13
    $region12: #{tpu_custom_call.1} parent=1 // pred_region
      %s38 = ssub.s32 2176, 2176
      %39 = vsyncadd [#allocation6], %s38
      %s40 = sshll.u32 [#allocation7], 4
      %s41 = int_to_ptr.vmem [resolvable:$true] %s40
      %46 = dma.hbm_to_vmem [thread:$0]  %s2, 2176, %s41, [#allocation6], 128, 128, 8
    $region13: #{tpu_custom_call.1} parent=1 // pred_fallthru
      _
    // Predicated region
    $region14: #{tpu_custom_call.1} parent=1 // pred_check
      _
    $region15: #{tpu_custom_call.1} parent=1 // pred_check_branch
      %48 = sbr.rel (0) target = $region17
    $region16: #{tpu_custom_call.1} parent=1 // pred_region
      %49 = dma.done [#allocation3], 256
    $region17: #{tpu_custom_call.1} parent=1 // pred_fallthru
      _
    // Predicated region
    $region18: #{tpu_custom_call.1} parent=1 // pred_check
      _
    $region19: #{tpu_custom_call.1} parent=1 // pred_check_branch
      %51 = sbr.rel (0) target = $region21
    $region20: #{tpu_custom_call.1} parent=1 // pred_region
      %52 = dma.done [#allocation6], 256
    $region21: #{tpu_custom_call.1} parent=1 // pred_fallthru
      _
    // Predicated region
    $region22: #{tpu_custom_call.1} parent=1 // pred_check
      _
    $region23: #{tpu_custom_call.1} parent=1 // pred_check_branch
      %54 = sbr.rel (0) target = $region25
    $region24: #{tpu_custom_call.1} parent=1 // pred_region
      %55 = dma.done [#allocation6], 2176
    $region25: #{tpu_custom_call.1} parent=1 // pred_fallthru
      _
    %v56 = vld [vmem:[#allocation7] sm:$0xff]
    %v57 = vld [vmem:[#allocation7 + $0x8] sm:$0xff]
    %v58 = vld [vmem:[#allocation7 + $0x10] sm:$0xff]
    %v59 = vld [vmem:[#allocation7 + $0x18] sm:$0xff]
    %v60 = vld [vmem:[#allocation7 + $0x20] sm:$0xff]
    %v61 = vld [vmem:[#allocation7 + $0x28] sm:$0xff]
    %v62 = vld [vmem:[#allocation7 + $0x30] sm:$0xff]
    %v63 = vld [vmem:[#allocation7 + $0x38] sm:$0xff]
    %v64 = vld [vmem:[#allocation7 + $0x40] sm:$0xff]
    %v65 = vld [vmem:[#allocation7 + $0x48] sm:$0xff]
    %v66 = vld [vmem:[#allocation7 + $0x50] sm:$0xff]
    %v67 = vld [vmem:[#allocation7 + $0x58] sm:$0xff]
    %v68 = vld [vmem:[#allocation7 + $0x60] sm:$0xff]
    %v69 = vld [vmem:[#allocation7 + $0x68] sm:$0xff]
    %v70 = vld [vmem:[#allocation7 + $0x70] sm:$0xff]
    %v71 = vld [vmem:[#allocation7 + $0x78] sm:$0xff]
    %v72 = vld [vmem:[#allocation7 + $0x80] sm:$0x1]
    %v73 = vld [vmem:[#allocation7 + $0x81] sm:$0x1]
    %v74 = vld [vmem:[#allocation7 + $0x82] sm:$0x1]
    %v75 = vld [vmem:[#allocation2] sm:$0xff]
    %v76 = vld [vmem:[#allocation2 + $0x8] sm:$0xff]
    %v77 = vld [vmem:[#allocation5] sm:$0xff]
    %v78 = vld [vmem:[#allocation5 + $0x8] sm:$0xff]
    %vm79 = vcmask 261120
    %v80 = vsel %vm79, %v75, 0.0
    %81 = vadd.xlane.f32.xlu0 %v80
    %v82 = vpop.xlane.xlu0 %81
    %v83 = vsel %vm79, %v76, 0.0
    %84 = vadd.xlane.f32.xlu0 %v83
    %v85 = vpop.xlane.xlu0 %84
    %v86 = vrcp.pop 32.0
    %v87 = vmul.f32 %v82, %v86
    %v88 = vmul.f32 %v85, %v86
    %v89 = vsub.f32 %v75, %v87
    %v90 = vsub.f32 %v76, %v88
    %v91 = vmul.f32 %v89, %v89
    %v92 = vmul.f32 %v90, %v90
    %v93 = vsel %vm79, %v91, 0.0
    %94 = vadd.xlane.f32.xlu0 %v93
    %v95 = vpop.xlane.xlu0 %94
    %v96 = vsel %vm79, %v92, 0.0
    %97 = vadd.xlane.f32.xlu0 %v96
    %v98 = vpop.xlane.xlu0 %97
    %v99 = vmul.f32 %v95, %v86
    %v100 = vmul.f32 %v98, %v86
    %v101 = vadd.f32 %v99, 1e-05
    %v102 = vadd.f32 %v100, 1e-05
    %v103 = vrsqrt.pop %v101
    %v104 = vrsqrt.pop %v102
    %v105 = vmul.f32 %v89, %v103
    %v106 = vmul.f32 %v90, %v104
    %v107 = vlaneseq
    %v108 = vshrl.u32 %v107, 7
    %v109 = vsub.s32 0, %v108
    %v110 = vrot.slane %v73, %v109
    %v111 = vmul.f32 %v105, %v110
    %v112 = vmul.f32 %v106, %v110
    %114 = vrot.lane.b32.xlu0 %v110, 96
    %v115 = vpop.permute.xlu0 %114
    %v117 = vadd.f32 %v111, %v115
    %v118 = vadd.f32 %v112, %v115
    %v119 = vlaneseq
    %v120 = vshrl.u32 %v119, 7
    %v121 = vsub.s32 0, %v120
    %v122 = vrot.slane %v72, %v121
    %v124 = vsel %vm79, %v117, 0
    %v127 = vsel %vm79, %v118, 0
    %129 = vmatprep.subr.mxu0 0.0
    %130 = vmatpush1.msra.mxu0 0.0
    %131 = vmatprep.subr.mxu0 0.0
    %132 = vmatpush1.msra.mxu0 0.0
    %133 = vmatprep.subr.mxu0 0.0
    %134 = vmatpush1.msra.mxu0 0.0
    %135 = vmatprep.subr.mxu0 0.0
    %136 = vmatpush1.msra.mxu0 0.0
    %137 = vmatprep.subr.mxu0 0.0
    %138 = vmatpush1.msra.mxu0 0.0
    %139 = vmatprep.subr.mxu0 0.0
    %140 = vmatpush1.msra.mxu0 0.0
    %141 = vmatprep.subr.mxu0 0.0
    %142 = vmatpush1.msra.mxu0 0.0
    %143 = vmatprep.subr.mxu0 0.0
    %144 = vmatpush1.msra.mxu0 0.0
    %145 = vmatprep.subr.mxu0 0.0
    %146 = vmatpush1.msra.mxu0 0.0
    %147 = vmatprep.subr.mxu0 0.0
    %148 = vmatpush1.msra.mxu0 0.0
    %149 = vmatprep.subr.mxu0 0.0
    %150 = vmatpush1.msra.mxu0 0.0
    %151 = vmatprep.subr.mxu0 0.0
    %152 = vmatpush1.msra.mxu0 0.0
    %153 = vmatprep.subr.mxu0 0.0
    %154 = vmatpush1.msra.mxu0 %v59
    %155 = vmatprep.subr.mxu0 0.0
    %156 = vmatpush1.msra.mxu0 %v58
    %157 = vmatprep.subr.mxu0 0.0
    %158 = vmatpush1.msra.mxu0 %v57
    %159 = vmatprep.subr.mxu0 0.0
    %160 = vmatpush1.msra.mxu0 %v56
    %161 = vmatprep.subr.mxu0 0.0
    %162 = vmatpush2.msra.mxu0 0.0
    %163 = vmatprep.subr.mxu0 0.0
    %164 = vmatpush2.msra.mxu0 0.0
    %165 = vmatprep.subr.mxu0 0.0
    %166 = vmatpush2.msra.mxu0 0.0
    %167 = vmatprep.subr.mxu0 0.0
    %168 = vmatpush2.msra.mxu0 0.0
    %169 = vmatprep.subr.mxu0 0.0
    %170 = vmatpush2.msra.mxu0 0.0
    %171 = vmatprep.subr.mxu0 0.0
    %172 = vmatpush2.msra.mxu0 0.0
    %173 = vmatprep.subr.mxu0 0.0
    %174 = vmatpush2.msra.mxu0 0.0
    %175 = vmatprep.subr.mxu0 0.0
    %176 = vmatpush2.msra.mxu0 0.0
    %177 = vmatprep.subr.mxu0 0.0
    %178 = vmatpush2.msra.mxu0 0.0
    %179 = vmatprep.subr.mxu0 0.0
    %180 = vmatpush2.msra.mxu0 0.0
    %181 = vmatprep.subr.mxu0 0.0
    %182 = vmatpush2.msra.mxu0 0.0
    %183 = vmatprep.subr.mxu0 0.0
    %184 = vmatpush2.msra.mxu0 0.0
    %185 = vmatprep.subr.mxu0 0.0
    %186 = vmatpush2.msra.mxu0 0.0
    %187 = vmatprep.subr.mxu0 0.0
    %188 = vmatpush2.msra.mxu0 0.0
    %189 = vmatprep.subr.mxu0 0.0
    %190 = vmatpush2.msra.mxu0 0.0
    %191 = vmatprep.subr.mxu0 0.0
    %192 = vmatpush2.msra.mxu0 0.0
    %193 = vmatprep.mubr.f32.mxu0 0.0
    %194 = vmatmul.mubr.f32.gmra.mxu0 %v124
    %v195 = vpop.f32.mrf.mxu0
    %v196 = vadd.f32 %v122, %v195
    %v197 = vpop.f32.mrf.mxu0
    %198 = vmatprep.mubr.f32.mxu0 0.0
    %199 = vmatmul.mubr.f32.gmra.mxu0 %v127
    %v200 = vpop.f32.mrf.mxu0
    %v201 = vadd.f32 %v122, %v200
    %v202 = vpop.f32.mrf.mxu0
    %203 = vdwg.mxu0
    %v204 = vmul.f32 %v196, 0.35355338
    %v205 = vmul.f32 %v201, 0.35355338
    %208 = vrot.lane.b32.xlu0 %v196, 96
    %v209 = vpop.permute.xlu0 %208
    %210 = vrot.lane.b32.xlu0 %v201, 96
    %v211 = vpop.permute.xlu0 %210
    %vm212 = vcmask 64512
    %v214 = vsel %vm212, %v204, 0
    %v217 = vsel %vm212, %v205, 0
    %v219 = vsel %vm212, %v209, 0
    %v221 = vsel %vm212, %v211, 0
    %223 = vmatprep.subr.mxu0 0.0
    %224 = vmatpush1.xpose.msra.mxu0 0.0
    %225 = vmatprep.subr.mxu0 0.0
    %226 = vmatpush1.xpose.msra.mxu0 0.0
    %227 = vmatprep.subr.mxu0 0.0
    %228 = vmatpush1.xpose.msra.mxu0 0.0
    %229 = vmatprep.subr.mxu0 0.0
    %230 = vmatpush1.xpose.msra.mxu0 0.0
    %231 = vmatprep.subr.mxu0 0.0
    %232 = vmatpush1.xpose.msra.mxu0 0.0
    %233 = vmatprep.subr.mxu0 0.0
    %234 = vmatpush1.xpose.msra.mxu0 0.0
    %235 = vmatprep.subr.mxu0 0.0
    %236 = vmatpush1.xpose.msra.mxu0 0.0
    %237 = vmatprep.subr.mxu0 0.0
    %238 = vmatpush1.xpose.msra.mxu0 0.0
    %239 = vmatprep.subr.mxu0 0.0
    %240 = vmatpush1.xpose.msra.mxu0 0.0
    %241 = vmatprep.subr.mxu0 0.0
    %242 = vmatpush1.xpose.msra.mxu0 0.0
    %243 = vmatprep.subr.mxu0 0.0
    %244 = vmatpush1.xpose.msra.mxu0 0.0
    %245 = vmatprep.subr.mxu0 0.0
    %246 = vmatpush1.xpose.msra.mxu0 0.0
    %247 = vmatprep.subr.mxu0 0.0
    %248 = vmatpush1.xpose.msra.mxu0 0.0
    %249 = vmatprep.subr.mxu0 0.0
    %250 = vmatpush1.xpose.msra.mxu0 0.0
    %251 = vmatprep.subr.mxu0 0.0
    %252 = vmatpush1.xpose.msra.mxu0 %v221
    %253 = vmatprep.subr.mxu0 0.0
    %254 = vmatpush1.xpose.msra.mxu0 %v219
    %255 = vmatprep.subr.mxu0 0.0
    %256 = vmatpush2.xpose.msra.mxu0 0.0
    %257 = vmatprep.subr.mxu0 0.0
    %258 = vmatpush2.xpose.msra.mxu0 0.0
    %259 = vmatprep.subr.mxu0 0.0
    %260 = vmatpush2.xpose.msra.mxu0 0.0
    %261 = vmatprep.subr.mxu0 0.0
    %262 = vmatpush2.xpose.msra.mxu0 0.0
    %263 = vmatprep.subr.mxu0 0.0
    %264 = vmatpush2.xpose.msra.mxu0 0.0
    %265 = vmatprep.subr.mxu0 0.0
    %266 = vmatpush2.xpose.msra.mxu0 0.0
    %267 = vmatprep.subr.mxu0 0.0
    %268 = vmatpush2.xpose.msra.mxu0 0.0
    %269 = vmatprep.subr.mxu0 0.0
    %270 = vmatpush2.xpose.msra.mxu0 0.0
    %271 = vmatprep.subr.mxu0 0.0
    %272 = vmatpush2.xpose.msra.mxu0 0.0
    %273 = vmatprep.subr.mxu0 0.0
    %274 = vmatpush2.xpose.msra.mxu0 0.0
    %275 = vmatprep.subr.mxu0 0.0
    %276 = vmatpush2.xpose.msra.mxu0 0.0
    %277 = vmatprep.subr.mxu0 0.0
    %278 = vmatpush2.xpose.msra.mxu0 0.0
    %279 = vmatprep.subr.mxu0 0.0
    %280 = vmatpush2.xpose.msra.mxu0 0.0
    %281 = vmatprep.subr.mxu0 0.0
    %282 = vmatpush2.xpose.msra.mxu0 0.0
    %283 = vmatprep.subr.mxu0 0.0
    %284 = vmatpush2.xpose.msra.mxu0 0.0
    %285 = vmatprep.subr.mxu0 0.0
    %286 = vmatpush2.xpose.msra.mxu0 0.0
    %287 = vmatprep.mubr.f32.mxu0 0.0
    %288 = vmatmul.mubr.f32.gmra.mxu0 %v214
    %v289 = vpop.f32.mrf.mxu0
    %v290 = vadd.f32 %v77, %v289
    %v291 = vpop.f32.mrf.mxu0
    %292 = vmatprep.mubr.f32.mxu0 0.0
    %293 = vmatmul.mubr.f32.gmra.mxu0 %v217
    %v294 = vpop.f32.mrf.mxu0
    %v295 = vadd.f32 %v78, %v294
    %v296 = vpop.f32.mrf.mxu0
    %297 = vdwg.mxu0
    %vm298 = vcmask 130048
    %v299 = vsel %vm298, %v290, -inf
    %300 = vmax.xlane.f32.xlu0 %v299
    %v301 = vpop.xlane.xlu0 %300
    %v302 = vsel %vm298, %v295, -inf
    %303 = vmax.xlane.f32.xlu0 %v302
    %v304 = vpop.xlane.xlu0 %303
    %v305 = vsub.f32 %v290, %v301
    %v306 = vsub.f32 %v295, %v304
    %v307 = vmul.f32 %v305, 1.442695
    %v308 = vpow.pop %v307
    %v309 = vmul.f32 %v306, 1.442695
    %v310 = vpow.pop %v309
    %v311 = vsel %vm298, %v308, 0.0
    %312 = vadd.xlane.f32.xlu0 %v311
    %v313 = vpop.xlane.xlu0 %312
    %v314 = vsel %vm298, %v310, 0.0
    %315 = vadd.xlane.f32.xlu0 %v314
    %v316 = vpop.xlane.xlu0 %315
    %v317 = vrcp.pop %v313
    %v318 = vrcp.pop %v316
    %v319 = vmul.f32 %v308, %v317
    %v320 = vmul.f32 %v310, %v318
    %321 = vrot.lane.b32.xlu0 %v196, 64
    %v322 = vpop.permute.xlu0 %321
    %323 = vrot.lane.b32.xlu0 %v201, 64
    %v324 = vpop.permute.xlu0 %323
    %v328 = vsel %vm298, %v319, 0
    %v331 = vsel %vm298, %v320, 0
    %333 = vmatprep.subr.mxu0 0.0
    %334 = vmatpush1.msra.mxu0 0.0
    %335 = vmatprep.subr.mxu0 0.0
    %336 = vmatpush1.msra.mxu0 0.0
    %337 = vmatprep.subr.mxu0 0.0
    %338 = vmatpush1.msra.mxu0 0.0
    %339 = vmatprep.subr.mxu0 0.0
    %340 = vmatpush1.msra.mxu0 0.0
    %341 = vmatprep.subr.mxu0 0.0
    %342 = vmatpush1.msra.mxu0 0.0
    %343 = vmatprep.subr.mxu0 0.0
    %344 = vmatpush1.msra.mxu0 0.0
    %345 = vmatprep.subr.mxu0 0.0
    %346 = vmatpush1.msra.mxu0 0.0
    %347 = vmatprep.subr.mxu0 0.0
    %348 = vmatpush1.msra.mxu0 0.0
    %349 = vmatprep.subr.mxu0 0.0
    %350 = vmatpush1.msra.mxu0 0.0
    %351 = vmatprep.subr.mxu0 0.0
    %352 = vmatpush1.msra.mxu0 0.0
    %353 = vmatprep.subr.mxu0 0.0
    %354 = vmatpush1.msra.mxu0 0.0
    %355 = vmatprep.subr.mxu0 0.0
    %356 = vmatpush1.msra.mxu0 0.0
    %357 = vmatprep.subr.mxu0 0.0
    %358 = vmatpush1.msra.mxu0 0.0
    %359 = vmatprep.subr.mxu0 0.0
    %360 = vmatpush1.msra.mxu0 0.0
    %361 = vmatprep.subr.mxu0 0.0
    %362 = vmatpush1.msra.mxu0 %v324
    %363 = vmatprep.subr.mxu0 0.0
    %364 = vmatpush1.msra.mxu0 %v322
    %365 = vmatprep.subr.mxu0 0.0
    %366 = vmatpush2.msra.mxu0 0.0
    %367 = vmatprep.subr.mxu0 0.0
    %368 = vmatpush2.msra.mxu0 0.0
    %369 = vmatprep.subr.mxu0 0.0
    %370 = vmatpush2.msra.mxu0 0.0
    %371 = vmatprep.subr.mxu0 0.0
    %372 = vmatpush2.msra.mxu0 0.0
    %373 = vmatprep.subr.mxu0 0.0
    %374 = vmatpush2.msra.mxu0 0.0
    %375 = vmatprep.subr.mxu0 0.0
    %376 = vmatpush2.msra.mxu0 0.0
    %377 = vmatprep.subr.mxu0 0.0
    %378 = vmatpush2.msra.mxu0 0.0
    %379 = vmatprep.subr.mxu0 0.0
    %380 = vmatpush2.msra.mxu0 0.0
    %381 = vmatprep.subr.mxu0 0.0
    %382 = vmatpush2.msra.mxu0 0.0
    %383 = vmatprep.subr.mxu0 0.0
    %384 = vmatpush2.msra.mxu0 0.0
    %385 = vmatprep.subr.mxu0 0.0
    %386 = vmatpush2.msra.mxu0 0.0
    %387 = vmatprep.subr.mxu0 0.0
    %388 = vmatpush2.msra.mxu0 0.0
    %389 = vmatprep.subr.mxu0 0.0
    %390 = vmatpush2.msra.mxu0 0.0
    %391 = vmatprep.subr.mxu0 0.0
    %392 = vmatpush2.msra.mxu0 0.0
    %393 = vmatprep.subr.mxu0 0.0
    %394 = vmatpush2.msra.mxu0 0.0
    %395 = vmatprep.subr.mxu0 0.0
    %396 = vmatpush2.msra.mxu0 0.0
    %397 = vmatprep.mubr.f32.mxu0 0.0
    %398 = vmatmul.mubr.f32.gmra.mxu0 %v328
    %v399 = vpop.f32.mrf.mxu0
    %v400 = vadd.f32 0.0, %v399
    %v401 = vpop.f32.mrf.mxu0
    %402 = vmatprep.mubr.f32.mxu0 0.0
    %403 = vmatmul.mubr.f32.gmra.mxu0 %v331
    %v404 = vpop.f32.mrf.mxu0
    %v405 = vadd.f32 0.0, %v404
    %v406 = vpop.f32.mrf.mxu0
    %407 = vdwg.mxu0
    %408 = vrot.lane.b32.xlu0 %v204, 120
    %v409 = vpop.permute.xlu0 %408
    %410 = vrot.lane.b32.xlu0 %v205, 120
    %v411 = vpop.permute.xlu0 %410
    %412 = vrot.lane.b32.xlu0 %v196, 88
    %v413 = vpop.permute.xlu0 %412
    %414 = vrot.lane.b32.xlu0 %v201, 88
    %v415 = vpop.permute.xlu0 %414
    %v416 = vsel %vm212, %v409, 0
    %v418 = vsel %vm212, %v411, 0
    %v420 = vsel %vm212, %v413, 0
    %v422 = vsel %vm212, %v415, 0
    %424 = vmatprep.subr.mxu0 0.0
    %425 = vmatpush1.xpose.msra.mxu0 0.0
    %426 = vmatprep.subr.mxu0 0.0
    %427 = vmatpush1.xpose.msra.mxu0 0.0
    %428 = vmatprep.subr.mxu0 0.0
    %429 = vmatpush1.xpose.msra.mxu0 0.0
    %430 = vmatprep.subr.mxu0 0.0
    %431 = vmatpush1.xpose.msra.mxu0 0.0
    %432 = vmatprep.subr.mxu0 0.0
    %433 = vmatpush1.xpose.msra.mxu0 0.0
    %434 = vmatprep.subr.mxu0 0.0
    %435 = vmatpush1.xpose.msra.mxu0 0.0
    %436 = vmatprep.subr.mxu0 0.0
    %437 = vmatpush1.xpose.msra.mxu0 0.0
    %438 = vmatprep.subr.mxu0 0.0
    %439 = vmatpush1.xpose.msra.mxu0 0.0
    %440 = vmatprep.subr.mxu0 0.0
    %441 = vmatpush1.xpose.msra.mxu0 0.0
    %442 = vmatprep.subr.mxu0 0.0
    %443 = vmatpush1.xpose.msra.mxu0 0.0
    %444 = vmatprep.subr.mxu0 0.0
    %445 = vmatpush1.xpose.msra.mxu0 0.0
    %446 = vmatprep.subr.mxu0 0.0
    %447 = vmatpush1.xpose.msra.mxu0 0.0
    %448 = vmatprep.subr.mxu0 0.0
    %449 = vmatpush1.xpose.msra.mxu0 0.0
    %450 = vmatprep.subr.mxu0 0.0
    %451 = vmatpush1.xpose.msra.mxu0 0.0
    %452 = vmatprep.subr.mxu0 0.0
    %453 = vmatpush1.xpose.msra.mxu0 %v422
    %454 = vmatprep.subr.mxu0 0.0
    %455 = vmatpush1.xpose.msra.mxu0 %v420
    %456 = vmatprep.subr.mxu0 0.0
    %457 = vmatpush2.xpose.msra.mxu0 0.0
    %458 = vmatprep.subr.mxu0 0.0
    %459 = vmatpush2.xpose.msra.mxu0 0.0
    %460 = vmatprep.subr.mxu0 0.0
    %461 = vmatpush2.xpose.msra.mxu0 0.0
    %462 = vmatprep.subr.mxu0 0.0
    %463 = vmatpush2.xpose.msra.mxu0 0.0
    %464 = vmatprep.subr.mxu0 0.0
    %465 = vmatpush2.xpose.msra.mxu0 0.0
    %466 = vmatprep.subr.mxu0 0.0
    %467 = vmatpush2.xpose.msra.mxu0 0.0
    %468 = vmatprep.subr.mxu0 0.0
    %469 = vmatpush2.xpose.msra.mxu0 0.0
    %470 = vmatprep.subr.mxu0 0.0
    %471 = vmatpush2.xpose.msra.mxu0 0.0
    %472 = vmatprep.subr.mxu0 0.0
    %473 = vmatpush2.xpose.msra.mxu0 0.0
    %474 = vmatprep.subr.mxu0 0.0
    %475 = vmatpush2.xpose.msra.mxu0 0.0
    %476 = vmatprep.subr.mxu0 0.0
    %477 = vmatpush2.xpose.msra.mxu0 0.0
    %478 = vmatprep.subr.mxu0 0.0
    %479 = vmatpush2.xpose.msra.mxu0 0.0
    %480 = vmatprep.subr.mxu0 0.0
    %481 = vmatpush2.xpose.msra.mxu0 0.0
    %482 = vmatprep.subr.mxu0 0.0
    %483 = vmatpush2.xpose.msra.mxu0 0.0
    %484 = vmatprep.subr.mxu0 0.0
    %485 = vmatpush2.xpose.msra.mxu0 0.0
    %486 = vmatprep.subr.mxu0 0.0
    %487 = vmatpush2.xpose.msra.mxu0 0.0
    %488 = vmatprep.mubr.f32.mxu0 0.0
    %489 = vmatmul.mubr.f32.gmra.mxu0 %v416
    %v490 = vpop.f32.mrf.mxu0
    %v491 = vadd.f32 %v77, %v490
    %v492 = vpop.f32.mrf.mxu0
    %493 = vmatprep.mubr.f32.mxu0 0.0
    %494 = vmatmul.mubr.f32.gmra.mxu0 %v418
    %v495 = vpop.f32.mrf.mxu0
    %v496 = vadd.f32 %v78, %v495
    %v497 = vpop.f32.mrf.mxu0
    %498 = vdwg.mxu0
    %v499 = vsel %vm298, %v491, -inf
    %500 = vmax.xlane.f32.xlu0 %v499
    %v501 = vpop.xlane.xlu0 %500
    %v502 = vsel %vm298, %v496, -inf
    %503 = vmax.xlane.f32.xlu0 %v502
    %v504 = vpop.xlane.xlu0 %503
    %v505 = vsub.f32 %v491, %v501
    %v506 = vsub.f32 %v496, %v504
    %v507 = vmul.f32 %v505, 1.442695
    %v508 = vpow.pop %v507
    %v509 = vmul.f32 %v506, 1.442695
    %v510 = vpow.pop %v509
    %v511 = vsel %vm298, %v508, 0.0
    %512 = vadd.xlane.f32.xlu0 %v511
    %v513 = vpop.xlane.xlu0 %512
    %v514 = vsel %vm298, %v510, 0.0
    %515 = vadd.xlane.f32.xlu0 %v514
    %v516 = vpop.xlane.xlu0 %515
    %v517 = vrcp.pop %v513
    %v518 = vrcp.pop %v516
    %v519 = vmul.f32 %v508, %v517
    %v520 = vmul.f32 %v510, %v518
    %521 = vrot.lane.b32.xlu0 %v196, 56
    %v522 = vpop.permute.xlu0 %521
    %523 = vrot.lane.b32.xlu0 %v201, 56
    %v524 = vpop.permute.xlu0 %523
    %v528 = vsel %vm298, %v519, 0
    %v531 = vsel %vm298, %v520, 0
    %533 = vmatprep.subr.mxu0 0.0
    %534 = vmatpush1.msra.mxu0 0.0
    %535 = vmatprep.subr.mxu0 0.0
    %536 = vmatpush1.msra.mxu0 0.0
    %537 = vmatprep.subr.mxu0 0.0
    %538 = vmatpush1.msra.mxu0 0.0
    %539 = vmatprep.subr.mxu0 0.0
    %540 = vmatpush1.msra.mxu0 0.0
    %541 = vmatprep.subr.mxu0 0.0
    %542 = vmatpush1.msra.mxu0 0.0
    %543 = vmatprep.subr.mxu0 0.0
    %544 = vmatpush1.msra.mxu0 0.0
    %545 = vmatprep.subr.mxu0 0.0
    %546 = vmatpush1.msra.mxu0 0.0
    %547 = vmatprep.subr.mxu0 0.0
    %548 = vmatpush1.msra.mxu0 0.0
    %549 = vmatprep.subr.mxu0 0.0
    %550 = vmatpush1.msra.mxu0 0.0
    %551 = vmatprep.subr.mxu0 0.0
    %552 = vmatpush1.msra.mxu0 0.0
    %553 = vmatprep.subr.mxu0 0.0
    %554 = vmatpush1.msra.mxu0 0.0
    %555 = vmatprep.subr.mxu0 0.0
    %556 = vmatpush1.msra.mxu0 0.0
    %557 = vmatprep.subr.mxu0 0.0
    %558 = vmatpush1.msra.mxu0 0.0
    %559 = vmatprep.subr.mxu0 0.0
    %560 = vmatpush1.msra.mxu0 0.0
    %561 = vmatprep.subr.mxu0 0.0
    %562 = vmatpush1.msra.mxu0 %v524
    %563 = vmatprep.subr.mxu0 0.0
    %564 = vmatpush1.msra.mxu0 %v522
    %565 = vmatprep.subr.mxu0 0.0
    %566 = vmatpush2.msra.mxu0 0.0
    %567 = vmatprep.subr.mxu0 0.0
    %568 = vmatpush2.msra.mxu0 0.0
    %569 = vmatprep.subr.mxu0 0.0
    %570 = vmatpush2.msra.mxu0 0.0
    %571 = vmatprep.subr.mxu0 0.0
    %572 = vmatpush2.msra.mxu0 0.0
    %573 = vmatprep.subr.mxu0 0.0
    %574 = vmatpush2.msra.mxu0 0.0
    %575 = vmatprep.subr.mxu0 0.0
    %576 = vmatpush2.msra.mxu0 0.0
    %577 = vmatprep.subr.mxu0 0.0
    %578 = vmatpush2.msra.mxu0 0.0
    %579 = vmatprep.subr.mxu0 0.0
    %580 = vmatpush2.msra.mxu0 0.0
    %581 = vmatprep.subr.mxu0 0.0
    %582 = vmatpush2.msra.mxu0 0.0
    %583 = vmatprep.subr.mxu0 0.0
    %584 = vmatpush2.msra.mxu0 0.0
    %585 = vmatprep.subr.mxu0 0.0
    %586 = vmatpush2.msra.mxu0 0.0
    %587 = vmatprep.subr.mxu0 0.0
    %588 = vmatpush2.msra.mxu0 0.0
    %589 = vmatprep.subr.mxu0 0.0
    %590 = vmatpush2.msra.mxu0 0.0
    %591 = vmatprep.subr.mxu0 0.0
    %592 = vmatpush2.msra.mxu0 0.0
    %593 = vmatprep.subr.mxu0 0.0
    %594 = vmatpush2.msra.mxu0 0.0
    %595 = vmatprep.subr.mxu0 0.0
    %596 = vmatpush2.msra.mxu0 0.0
    %597 = vmatprep.mubr.f32.mxu0 0.0
    %598 = vmatmul.mubr.f32.gmra.mxu0 %v528
    %v599 = vpop.f32.mrf.mxu0
    %v600 = vadd.f32 0.0, %v599
    %v601 = vpop.f32.mrf.mxu0
    %602 = vmatprep.mubr.f32.mxu0 0.0
    %603 = vmatmul.mubr.f32.gmra.mxu0 %v531
    %v604 = vpop.f32.mrf.mxu0
    %v605 = vadd.f32 0.0, %v604
    %v606 = vpop.f32.mrf.mxu0
    %607 = vdwg.mxu0
    %608 = vrot.lane.b32.xlu0 %v204, 112
    %v609 = vpop.permute.xlu0 %608
    %610 = vrot.lane.b32.xlu0 %v205, 112
    %v611 = vpop.permute.xlu0 %610
    %612 = vrot.lane.b32.xlu0 %v196, 80
    %v613 = vpop.permute.xlu0 %612
    %614 = vrot.lane.b32.xlu0 %v201, 80
    %v615 = vpop.permute.xlu0 %614
    %v616 = vsel %vm212, %v609, 0
    %v618 = vsel %vm212, %v611, 0
    %v620 = vsel %vm212, %v613, 0
    %v622 = vsel %vm212, %v615, 0
    %624 = vmatprep.subr.mxu0 0.0
    %625 = vmatpush1.xpose.msra.mxu0 0.0
    %626 = vmatprep.subr.mxu0 0.0
    %627 = vmatpush1.xpose.msra.mxu0 0.0
    %628 = vmatprep.subr.mxu0 0.0
    %629 = vmatpush1.xpose.msra.mxu0 0.0
    %630 = vmatprep.subr.mxu0 0.0
    %631 = vmatpush1.xpose.msra.mxu0 0.0
    %632 = vmatprep.subr.mxu0 0.0
    %633 = vmatpush1.xpose.msra.mxu0 0.0
    %634 = vmatprep.subr.mxu0 0.0
    %635 = vmatpush1.xpose.msra.mxu0 0.0
    %636 = vmatprep.subr.mxu0 0.0
    %637 = vmatpush1.xpose.msra.mxu0 0.0
    %638 = vmatprep.subr.mxu0 0.0
    %639 = vmatpush1.xpose.msra.mxu0 0.0
    %640 = vmatprep.subr.mxu0 0.0
    %641 = vmatpush1.xpose.msra.mxu0 0.0
    %642 = vmatprep.subr.mxu0 0.0
    %643 = vmatpush1.xpose.msra.mxu0 0.0
    %644 = vmatprep.subr.mxu0 0.0
    %645 = vmatpush1.xpose.msra.mxu0 0.0
    %646 = vmatprep.subr.mxu0 0.0
    %647 = vmatpush1.xpose.msra.mxu0 0.0
    %648 = vmatprep.subr.mxu0 0.0
    %649 = vmatpush1.xpose.msra.mxu0 0.0
    %650 = vmatprep.subr.mxu0 0.0
    %651 = vmatpush1.xpose.msra.mxu0 0.0
    %652 = vmatprep.subr.mxu0 0.0
    %653 = vmatpush1.xpose.msra.mxu0 %v622
    %654 = vmatprep.subr.mxu0 0.0
    %655 = vmatpush1.xpose.msra.mxu0 %v620
    %656 = vmatprep.subr.mxu0 0.0
    %657 = vmatpush2.xpose.msra.mxu0 0.0
    %658 = vmatprep.subr.mxu0 0.0
    %659 = vmatpush2.xpose.msra.mxu0 0.0
    %660 = vmatprep.subr.mxu0 0.0
    %661 = vmatpush2.xpose.msra.mxu0 0.0
    %662 = vmatprep.subr.mxu0 0.0
    %663 = vmatpush2.xpose.msra.mxu0 0.0
    %664 = vmatprep.subr.mxu0 0.0
    %665 = vmatpush2.xpose.msra.mxu0 0.0
    %666 = vmatprep.subr.mxu0 0.0
    %667 = vmatpush2.xpose.msra.mxu0 0.0
    %668 = vmatprep.subr.mxu0 0.0
    %669 = vmatpush2.xpose.msra.mxu0 0.0
    %670 = vmatprep.subr.mxu0 0.0
    %671 = vmatpush2.xpose.msra.mxu0 0.0
    %672 = vmatprep.subr.mxu0 0.0
    %673 = vmatpush2.xpose.msra.mxu0 0.0
    %674 = vmatprep.subr.mxu0 0.0
    %675 = vmatpush2.xpose.msra.mxu0 0.0
    %676 = vmatprep.subr.mxu0 0.0
    %677 = vmatpush2.xpose.msra.mxu0 0.0
    %678 = vmatprep.subr.mxu0 0.0
    %679 = vmatpush2.xpose.msra.mxu0 0.0
    %680 = vmatprep.subr.mxu0 0.0
    %681 = vmatpush2.xpose.msra.mxu0 0.0
    %682 = vmatprep.subr.mxu0 0.0
    %683 = vmatpush2.xpose.msra.mxu0 0.0
    %684 = vmatprep.subr.mxu0 0.0
    %685 = vmatpush2.xpose.msra.mxu0 0.0
    %686 = vmatprep.subr.mxu0 0.0
    %687 = vmatpush2.xpose.msra.mxu0 0.0
    %688 = vmatprep.mubr.f32.mxu0 0.0
    %689 = vmatmul.mubr.f32.gmra.mxu0 %v616
    %v690 = vpop.f32.mrf.mxu0
    %v691 = vadd.f32 %v77, %v690
    %v692 = vpop.f32.mrf.mxu0
    %693 = vmatprep.mubr.f32.mxu0 0.0
    %694 = vmatmul.mubr.f32.gmra.mxu0 %v618
    %v695 = vpop.f32.mrf.mxu0
    %v696 = vadd.f32 %v78, %v695
    %v697 = vpop.f32.mrf.mxu0
    %698 = vdwg.mxu0
    %v699 = vsel %vm298, %v691, -inf
    %700 = vmax.xlane.f32.xlu0 %v699
    %v701 = vpop.xlane.xlu0 %700
    %v702 = vsel %vm298, %v696, -inf
    %703 = vmax.xlane.f32.xlu0 %v702
    %v704 = vpop.xlane.xlu0 %703
    %v705 = vsub.f32 %v691, %v701
    %v706 = vsub.f32 %v696, %v704
    %v707 = vmul.f32 %v705, 1.442695
    %v708 = vpow.pop %v707
    %v709 = vmul.f32 %v706, 1.442695
    %v710 = vpow.pop %v709
    %v711 = vsel %vm298, %v708, 0.0
    %712 = vadd.xlane.f32.xlu0 %v711
    %v713 = vpop.xlane.xlu0 %712
    %v714 = vsel %vm298, %v710, 0.0
    %715 = vadd.xlane.f32.xlu0 %v714
    %v716 = vpop.xlane.xlu0 %715
    %v717 = vrcp.pop %v713
    %v718 = vrcp.pop %v716
    %v719 = vmul.f32 %v708, %v717
    %v720 = vmul.f32 %v710, %v718
    %721 = vrot.lane.b32.xlu0 %v196, 48
    %v722 = vpop.permute.xlu0 %721
    %723 = vrot.lane.b32.xlu0 %v201, 48
    %v724 = vpop.permute.xlu0 %723
    %v728 = vsel %vm298, %v719, 0
    %v731 = vsel %vm298, %v720, 0
    %733 = vmatprep.subr.mxu0 0.0
    %734 = vmatpush1.msra.mxu0 0.0
    %735 = vmatprep.subr.mxu0 0.0
    %736 = vmatpush1.msra.mxu0 0.0
    %737 = vmatprep.subr.mxu0 0.0
    %738 = vmatpush1.msra.mxu0 0.0
    %739 = vmatprep.subr.mxu0 0.0
    %740 = vmatpush1.msra.mxu0 0.0
    %741 = vmatprep.subr.mxu0 0.0
    %742 = vmatpush1.msra.mxu0 0.0
    %743 = vmatprep.subr.mxu0 0.0
    %744 = vmatpush1.msra.mxu0 0.0
    %745 = vmatprep.subr.mxu0 0.0
    %746 = vmatpush1.msra.mxu0 0.0
    %747 = vmatprep.subr.mxu0 0.0
    %748 = vmatpush1.msra.mxu0 0.0
    %749 = vmatprep.subr.mxu0 0.0
    %750 = vmatpush1.msra.mxu0 0.0
    %751 = vmatprep.subr.mxu0 0.0
    %752 = vmatpush1.msra.mxu0 0.0
    %753 = vmatprep.subr.mxu0 0.0
    %754 = vmatpush1.msra.mxu0 0.0
    %755 = vmatprep.subr.mxu0 0.0
    %756 = vmatpush1.msra.mxu0 0.0
    %757 = vmatprep.subr.mxu0 0.0
    %758 = vmatpush1.msra.mxu0 0.0
    %759 = vmatprep.subr.mxu0 0.0
    %760 = vmatpush1.msra.mxu0 0.0
    %761 = vmatprep.subr.mxu0 0.0
    %762 = vmatpush1.msra.mxu0 %v724
    %763 = vmatprep.subr.mxu0 0.0
    %764 = vmatpush1.msra.mxu0 %v722
    %765 = vmatprep.subr.mxu0 0.0
    %766 = vmatpush2.msra.mxu0 0.0
    %767 = vmatprep.subr.mxu0 0.0
    %768 = vmatpush2.msra.mxu0 0.0
    %769 = vmatprep.subr.mxu0 0.0
    %770 = vmatpush2.msra.mxu0 0.0
    %771 = vmatprep.subr.mxu0 0.0
    %772 = vmatpush2.msra.mxu0 0.0
    %773 = vmatprep.subr.mxu0 0.0
    %774 = vmatpush2.msra.mxu0 0.0
    %775 = vmatprep.subr.mxu0 0.0
    %776 = vmatpush2.msra.mxu0 0.0
    %777 = vmatprep.subr.mxu0 0.0
    %778 = vmatpush2.msra.mxu0 0.0
    %779 = vmatprep.subr.mxu0 0.0
    %780 = vmatpush2.msra.mxu0 0.0
    %781 = vmatprep.subr.mxu0 0.0
    %782 = vmatpush2.msra.mxu0 0.0
    %783 = vmatprep.subr.mxu0 0.0
    %784 = vmatpush2.msra.mxu0 0.0
    %785 = vmatprep.subr.mxu0 0.0
    %786 = vmatpush2.msra.mxu0 0.0
    %787 = vmatprep.subr.mxu0 0.0
    %788 = vmatpush2.msra.mxu0 0.0
    %789 = vmatprep.subr.mxu0 0.0
    %790 = vmatpush2.msra.mxu0 0.0
    %791 = vmatprep.subr.mxu0 0.0
    %792 = vmatpush2.msra.mxu0 0.0
    %793 = vmatprep.subr.mxu0 0.0
    %794 = vmatpush2.msra.mxu0 0.0
    %795 = vmatprep.subr.mxu0 0.0
    %796 = vmatpush2.msra.mxu0 0.0
    %797 = vmatprep.mubr.f32.mxu0 0.0
    %798 = vmatmul.mubr.f32.gmra.mxu0 %v728
    %v799 = vpop.f32.mrf.mxu0
    %v800 = vadd.f32 0.0, %v799
    %v801 = vpop.f32.mrf.mxu0
    %802 = vmatprep.mubr.f32.mxu0 0.0
    %803 = vmatmul.mubr.f32.gmra.mxu0 %v731
    %v804 = vpop.f32.mrf.mxu0
    %v805 = vadd.f32 0.0, %v804
    %v806 = vpop.f32.mrf.mxu0
    %807 = vdwg.mxu0
    %808 = vrot.lane.b32.xlu0 %v204, 104
    %v809 = vpop.permute.xlu0 %808
    %810 = vrot.lane.b32.xlu0 %v205, 104
    %v811 = vpop.permute.xlu0 %810
    %812 = vrot.lane.b32.xlu0 %v196, 72
    %v813 = vpop.permute.xlu0 %812
    %814 = vrot.lane.b32.xlu0 %v201, 72
    %v815 = vpop.permute.xlu0 %814
    %v816 = vsel %vm212, %v809, 0
    %v818 = vsel %vm212, %v811, 0
    %v820 = vsel %vm212, %v813, 0
    %v822 = vsel %vm212, %v815, 0
    %824 = vmatprep.subr.mxu0 0.0
    %825 = vmatpush1.xpose.msra.mxu0 0.0
    %826 = vmatprep.subr.mxu0 0.0
    %827 = vmatpush1.xpose.msra.mxu0 0.0
    %828 = vmatprep.subr.mxu0 0.0
    %829 = vmatpush1.xpose.msra.mxu0 0.0
    %830 = vmatprep.subr.mxu0 0.0
    %831 = vmatpush1.xpose.msra.mxu0 0.0
    %832 = vmatprep.subr.mxu0 0.0
    %833 = vmatpush1.xpose.msra.mxu0 0.0
    %834 = vmatprep.subr.mxu0 0.0
    %835 = vmatpush1.xpose.msra.mxu0 0.0
    %836 = vmatprep.subr.mxu0 0.0
    %837 = vmatpush1.xpose.msra.mxu0 0.0
    %838 = vmatprep.subr.mxu0 0.0
    %839 = vmatpush1.xpose.msra.mxu0 0.0
    %840 = vmatprep.subr.mxu0 0.0
    %841 = vmatpush1.xpose.msra.mxu0 0.0
    %842 = vmatprep.subr.mxu0 0.0
    %843 = vmatpush1.xpose.msra.mxu0 0.0
    %844 = vmatprep.subr.mxu0 0.0
    %845 = vmatpush1.xpose.msra.mxu0 0.0
    %846 = vmatprep.subr.mxu0 0.0
    %847 = vmatpush1.xpose.msra.mxu0 0.0
    %848 = vmatprep.subr.mxu0 0.0
    %849 = vmatpush1.xpose.msra.mxu0 0.0
    %850 = vmatprep.subr.mxu0 0.0
    %851 = vmatpush1.xpose.msra.mxu0 0.0
    %852 = vmatprep.subr.mxu0 0.0
    %853 = vmatpush1.xpose.msra.mxu0 %v822
    %854 = vmatprep.subr.mxu0 0.0
    %855 = vmatpush1.xpose.msra.mxu0 %v820
    %856 = vmatprep.subr.mxu0 0.0
    %857 = vmatpush2.xpose.msra.mxu0 0.0
    %858 = vmatprep.subr.mxu0 0.0
    %859 = vmatpush2.xpose.msra.mxu0 0.0
    %860 = vmatprep.subr.mxu0 0.0
    %861 = vmatpush2.xpose.msra.mxu0 0.0
    %862 = vmatprep.subr.mxu0 0.0
    %863 = vmatpush2.xpose.msra.mxu0 0.0
    %864 = vmatprep.subr.mxu0 0.0
    %865 = vmatpush2.xpose.msra.mxu0 0.0
    %866 = vmatprep.subr.mxu0 0.0
    %867 = vmatpush2.xpose.msra.mxu0 0.0
    %868 = vmatprep.subr.mxu0 0.0
    %869 = vmatpush2.xpose.msra.mxu0 0.0
    %870 = vmatprep.subr.mxu0 0.0
    %871 = vmatpush2.xpose.msra.mxu0 0.0
    %872 = vmatprep.subr.mxu0 0.0
    %873 = vmatpush2.xpose.msra.mxu0 0.0
    %874 = vmatprep.subr.mxu0 0.0
    %875 = vmatpush2.xpose.msra.mxu0 0.0
    %876 = vmatprep.subr.mxu0 0.0
    %877 = vmatpush2.xpose.msra.mxu0 0.0
    %878 = vmatprep.subr.mxu0 0.0
    %879 = vmatpush2.xpose.msra.mxu0 0.0
    %880 = vmatprep.subr.mxu0 0.0
    %881 = vmatpush2.xpose.msra.mxu0 0.0
    %882 = vmatprep.subr.mxu0 0.0
    %883 = vmatpush2.xpose.msra.mxu0 0.0
    %884 = vmatprep.subr.mxu0 0.0
    %885 = vmatpush2.xpose.msra.mxu0 0.0
    %886 = vmatprep.subr.mxu0 0.0
    %887 = vmatpush2.xpose.msra.mxu0 0.0
    %888 = vmatprep.mubr.f32.mxu0 0.0
    %889 = vmatmul.mubr.f32.gmra.mxu0 %v816
    %v890 = vpop.f32.mrf.mxu0
    %v891 = vadd.f32 %v77, %v890
    %v892 = vpop.f32.mrf.mxu0
    %893 = vmatprep.mubr.f32.mxu0 0.0
    %894 = vmatmul.mubr.f32.gmra.mxu0 %v818
    %v895 = vpop.f32.mrf.mxu0
    %v896 = vadd.f32 %v78, %v895
    %v897 = vpop.f32.mrf.mxu0
    %898 = vdwg.mxu0
    %v899 = vsel %vm298, %v891, -inf
    %900 = vmax.xlane.f32.xlu0 %v899
    %v901 = vpop.xlane.xlu0 %900
    %v902 = vsel %vm298, %v896, -inf
    %903 = vmax.xlane.f32.xlu0 %v902
    %v904 = vpop.xlane.xlu0 %903
    %v905 = vsub.f32 %v891, %v901
    %v906 = vsub.f32 %v896, %v904
    %v907 = vmul.f32 %v905, 1.442695
    %v908 = vpow.pop %v907
    %v909 = vmul.f32 %v906, 1.442695
    %v910 = vpow.pop %v909
    %v911 = vsel %vm298, %v908, 0.0
    %912 = vadd.xlane.f32.xlu0 %v911
    %v913 = vpop.xlane.xlu0 %912
    %v914 = vsel %vm298, %v910, 0.0
    %915 = vadd.xlane.f32.xlu0 %v914
    %v916 = vpop.xlane.xlu0 %915
    %v917 = vrcp.pop %v913
    %v918 = vrcp.pop %v916
    %v919 = vmul.f32 %v908, %v917
    %v920 = vmul.f32 %v910, %v918
    %921 = vrot.lane.b32.xlu0 %v196, 40
    %v922 = vpop.permute.xlu0 %921
    %923 = vrot.lane.b32.xlu0 %v201, 40
    %v924 = vpop.permute.xlu0 %923
    %v928 = vsel %vm298, %v919, 0
    %v931 = vsel %vm298, %v920, 0
    %933 = vmatprep.subr.mxu0 0.0
    %934 = vmatpush1.msra.mxu0 0.0
    %935 = vmatprep.subr.mxu0 0.0
    %936 = vmatpush1.msra.mxu0 0.0
    %937 = vmatprep.subr.mxu0 0.0
    %938 = vmatpush1.msra.mxu0 0.0
    %939 = vmatprep.subr.mxu0 0.0
    %940 = vmatpush1.msra.mxu0 0.0
    %941 = vmatprep.subr.mxu0 0.0
    %942 = vmatpush1.msra.mxu0 0.0
    %943 = vmatprep.subr.mxu0 0.0
    %944 = vmatpush1.msra.mxu0 0.0
    %945 = vmatprep.subr.mxu0 0.0
    %946 = vmatpush1.msra.mxu0 0.0
    %947 = vmatprep.subr.mxu0 0.0
    %948 = vmatpush1.msra.mxu0 0.0
    %949 = vmatprep.subr.mxu0 0.0
    %950 = vmatpush1.msra.mxu0 0.0
    %951 = vmatprep.subr.mxu0 0.0
    %952 = vmatpush1.msra.mxu0 0.0
    %953 = vmatprep.subr.mxu0 0.0
    %954 = vmatpush1.msra.mxu0 0.0
    %955 = vmatprep.subr.mxu0 0.0
    %956 = vmatpush1.msra.mxu0 0.0
    %957 = vmatprep.subr.mxu0 0.0
    %958 = vmatpush1.msra.mxu0 0.0
    %959 = vmatprep.subr.mxu0 0.0
    %960 = vmatpush1.msra.mxu0 0.0
    %961 = vmatprep.subr.mxu0 0.0
    %962 = vmatpush1.msra.mxu0 %v924
    %963 = vmatprep.subr.mxu0 0.0
    %964 = vmatpush1.msra.mxu0 %v922
    %965 = vmatprep.subr.mxu0 0.0
    %966 = vmatpush2.msra.mxu0 0.0
    %967 = vmatprep.subr.mxu0 0.0
    %968 = vmatpush2.msra.mxu0 0.0
    %969 = vmatprep.subr.mxu0 0.0
    %970 = vmatpush2.msra.mxu0 0.0
    %971 = vmatprep.subr.mxu0 0.0
    %972 = vmatpush2.msra.mxu0 0.0
    %973 = vmatprep.subr.mxu0 0.0
    %974 = vmatpush2.msra.mxu0 0.0
    %975 = vmatprep.subr.mxu0 0.0
    %976 = vmatpush2.msra.mxu0 0.0
    %977 = vmatprep.subr.mxu0 0.0
    %978 = vmatpush2.msra.mxu0 0.0
    %979 = vmatprep.subr.mxu0 0.0
    %980 = vmatpush2.msra.mxu0 0.0
    %981 = vmatprep.subr.mxu0 0.0
    %982 = vmatpush2.msra.mxu0 0.0
    %983 = vmatprep.subr.mxu0 0.0
    %984 = vmatpush2.msra.mxu0 0.0
    %985 = vmatprep.subr.mxu0 0.0
    %986 = vmatpush2.msra.mxu0 0.0
    %987 = vmatprep.subr.mxu0 0.0
    %988 = vmatpush2.msra.mxu0 0.0
    %989 = vmatprep.subr.mxu0 0.0
    %990 = vmatpush2.msra.mxu0 0.0
    %991 = vmatprep.subr.mxu0 0.0
    %992 = vmatpush2.msra.mxu0 0.0
    %993 = vmatprep.subr.mxu0 0.0
    %994 = vmatpush2.msra.mxu0 0.0
    %995 = vmatprep.subr.mxu0 0.0
    %996 = vmatpush2.msra.mxu0 0.0
    %997 = vmatprep.mubr.f32.mxu0 0.0
    %998 = vmatmul.mubr.f32.gmra.mxu0 %v928
    %v999 = vpop.f32.mrf.mxu0
    %v1000 = vadd.f32 0.0, %v999
    %v1001 = vpop.f32.mrf.mxu0
    %1002 = vmatprep.mubr.f32.mxu0 0.0
    %1003 = vmatmul.mubr.f32.gmra.mxu0 %v931
    %v1004 = vpop.f32.mrf.mxu0
    %v1005 = vadd.f32 0.0, %v1004
    %v1006 = vpop.f32.mrf.mxu0
    %1007 = vdwg.mxu0
    %1010 = vrot.lane.b32.xlu0 %v600, 8
    %v1011 = vpop.permute.xlu0 %1010
    %1012 = vrot.lane.b32.xlu0 %v605, 8
    %v1013 = vpop.permute.xlu0 %1012
    %1018 = vrot.lane.b32.xlu0 %v800, 16
    %v1019 = vpop.permute.xlu0 %1018
    %1020 = vrot.lane.b32.xlu0 %v805, 16
    %v1021 = vpop.permute.xlu0 %1020
    %1026 = vrot.lane.b32.xlu0 %v1000, 24
    %v1027 = vpop.permute.xlu0 %1026
    %1028 = vrot.lane.b32.xlu0 %v1005, 24
    %v1029 = vpop.permute.xlu0 %1028
    %v1032 = vsel %vm212, %v400, %v1011
    %v1033 = vsel %vm212, %v405, %v1013
    %v1034 = vsel %vm298, %v1032, %v1019
    %v1035 = vsel %vm298, %v1033, %v1021
    %vm1036 = vcmask 195584
    %v1037 = vsel %vm1036, %v1034, %v1027
    %v1038 = vsel %vm1036, %v1035, %v1029
    %1043 = vrot.lane.b32.xlu0 %v56, 32
    %v1044 = vpop.permute.xlu0 %1043
    %1045 = vrot.lane.b32.xlu0 %v57, 32
    %v1046 = vpop.permute.xlu0 %1045
    %1047 = vrot.lane.b32.xlu0 %v58, 32
    %v1048 = vpop.permute.xlu0 %1047
    %1049 = vrot.lane.b32.xlu0 %v59, 32
    %v1050 = vpop.permute.xlu0 %1049
    %v1056 = vsel %vm79, %v1037, 0
    %v1059 = vsel %vm79, %v1038, 0
    %1061 = vmatprep.subr.mxu0 0.0
    %1062 = vmatpush1.msra.mxu0 0.0
    %1063 = vmatprep.subr.mxu0 0.0
    %1064 = vmatpush1.msra.mxu0 0.0
    %1065 = vmatprep.subr.mxu0 0.0
    %1066 = vmatpush1.msra.mxu0 0.0
    %1067 = vmatprep.subr.mxu0 0.0
    %1068 = vmatpush1.msra.mxu0 0.0
    %1069 = vmatprep.subr.mxu0 0.0
    %1070 = vmatpush1.msra.mxu0 0.0
    %1071 = vmatprep.subr.mxu0 0.0
    %1072 = vmatpush1.msra.mxu0 0.0
    %1073 = vmatprep.subr.mxu0 0.0
    %1074 = vmatpush1.msra.mxu0 0.0
    %1075 = vmatprep.subr.mxu0 0.0
    %1076 = vmatpush1.msra.mxu0 0.0
    %1077 = vmatprep.subr.mxu0 0.0
    %1078 = vmatpush1.msra.mxu0 0.0
    %1079 = vmatprep.subr.mxu0 0.0
    %1080 = vmatpush1.msra.mxu0 0.0
    %1081 = vmatprep.subr.mxu0 0.0
    %1082 = vmatpush1.msra.mxu0 0.0
    %1083 = vmatprep.subr.mxu0 0.0
    %1084 = vmatpush1.msra.mxu0 0.0
    %1085 = vmatprep.subr.mxu0 0.0
    %1086 = vmatpush1.msra.mxu0 %v1050
    %1087 = vmatprep.subr.mxu0 0.0
    %1088 = vmatpush1.msra.mxu0 %v1048
    %1089 = vmatprep.subr.mxu0 0.0
    %1090 = vmatpush1.msra.mxu0 %v1046
    %1091 = vmatprep.subr.mxu0 0.0
    %1092 = vmatpush1.msra.mxu0 %v1044
    %1093 = vmatprep.subr.mxu0 0.0
    %1094 = vmatpush2.msra.mxu0 0.0
    %1095 = vmatprep.subr.mxu0 0.0
    %1096 = vmatpush2.msra.mxu0 0.0
    %1097 = vmatprep.subr.mxu0 0.0
    %1098 = vmatpush2.msra.mxu0 0.0
    %1099 = vmatprep.subr.mxu0 0.0
    %1100 = vmatpush2.msra.mxu0 0.0
    %1101 = vmatprep.subr.mxu0 0.0
    %1102 = vmatpush2.msra.mxu0 0.0
    %1103 = vmatprep.subr.mxu0 0.0
    %1104 = vmatpush2.msra.mxu0 0.0
    %1105 = vmatprep.subr.mxu0 0.0
    %1106 = vmatpush2.msra.mxu0 0.0
    %1107 = vmatprep.subr.mxu0 0.0
    %1108 = vmatpush2.msra.mxu0 0.0
    %1109 = vmatprep.subr.mxu0 0.0
    %1110 = vmatpush2.msra.mxu0 0.0
    %1111 = vmatprep.subr.mxu0 0.0
    %1112 = vmatpush2.msra.mxu0 0.0
    %1113 = vmatprep.subr.mxu0 0.0
    %1114 = vmatpush2.msra.mxu0 0.0
    %1115 = vmatprep.subr.mxu0 0.0
    %1116 = vmatpush2.msra.mxu0 0.0
    %1117 = vmatprep.subr.mxu0 0.0
    %1118 = vmatpush2.msra.mxu0 0.0
    %1119 = vmatprep.subr.mxu0 0.0
    %1120 = vmatpush2.msra.mxu0 0.0
    %1121 = vmatprep.subr.mxu0 0.0
    %1122 = vmatpush2.msra.mxu0 0.0
    %1123 = vmatprep.subr.mxu0 0.0
    %1124 = vmatpush2.msra.mxu0 0.0
    %1125 = vmatprep.mubr.f32.mxu0 0.0
    %1126 = vmatmul.mubr.f32.gmra.mxu0 %v1056
    %v1127 = vpop.f32.mrf.mxu0
    %v1128 = vadd.f32 0.0, %v1127
    %v1129 = vpop.f32.mrf.mxu0
    %1130 = vmatprep.mubr.f32.mxu0 0.0
    %1131 = vmatmul.mubr.f32.gmra.mxu0 %v1059
    %v1132 = vpop.f32.mrf.mxu0
    %v1133 = vadd.f32 0.0, %v1132
    %v1134 = vpop.f32.mrf.mxu0
    %1135 = vdwg.mxu0
    %v1136 = vadd.f32 %v75, %v1128
    %v1137 = vadd.f32 %v76, %v1133
    %v1138 = vlaneseq
    %v1139 = vshrl.u32 %v1138, 7
    %v1140 = vsub.s32 0, %v1139
    %v1141 = vrot.slane %v74, %v1140
    %v1142 = vadd.f32 %v1136, %v1141
    %v1143 = vadd.f32 %v1137, %v1141
    %v1144 = vsel %vm79, %v1142, 0.0
    %1145 = vadd.xlane.f32.xlu0 %v1144
    %v1146 = vpop.xlane.xlu0 %1145
    %v1147 = vsel %vm79, %v1143, 0.0
    %1148 = vadd.xlane.f32.xlu0 %v1147
    %v1149 = vpop.xlane.xlu0 %1148
    %v1150 = vmul.f32 %v1146, %v86
    %v1151 = vmul.f32 %v1149, %v86
    %v1152 = vsub.f32 %v1142, %v1150
    %v1153 = vsub.f32 %v1143, %v1151
    %v1154 = vmul.f32 %v1152, %v1152
    %v1155 = vmul.f32 %v1153, %v1153
    %v1156 = vsel %vm79, %v1154, 0.0
    %1157 = vadd.xlane.f32.xlu0 %v1156
    %v1158 = vpop.xlane.xlu0 %1157
    %v1159 = vsel %vm79, %v1155, 0.0
    %1160 = vadd.xlane.f32.xlu0 %v1159
    %v1161 = vpop.xlane.xlu0 %1160
    %v1162 = vmul.f32 %v1158, %v86
    %v1163 = vmul.f32 %v1161, %v86
    %v1164 = vadd.f32 %v1162, 1e-05
    %v1165 = vadd.f32 %v1163, 1e-05
    %v1166 = vrsqrt.pop %v1164
    %v1167 = vrsqrt.pop %v1165
    %v1168 = vmul.f32 %v1152, %v1166
    %v1169 = vmul.f32 %v1153, %v1167
    %1170 = vrot.lane.b32.xlu0 %v110, 64
    %v1171 = vpop.permute.xlu0 %1170
    %v1173 = vmul.f32 %v1168, %v1171
    %v1174 = vmul.f32 %v1169, %v1171
    %1175 = vrot.lane.b32.xlu0 %v110, 32
    %v1176 = vpop.permute.xlu0 %1175
    %v1178 = vadd.f32 %v1173, %v1176
    %v1179 = vadd.f32 %v1174, %v1176
    %1181 = vrot.lane.b32.xlu0 %v1141, 64
    %v1182 = vpop.permute.xlu0 %1181
    %v1185 = vsel %vm79, %v1178, 0
    %v1188 = vsel %vm79, %v1179, 0
    %1190 = vmatprep.subr.mxu0 0.0
    %1191 = vmatpush1.msra.mxu0 0.0
    %1192 = vmatprep.subr.mxu0 0.0
    %1193 = vmatpush1.msra.mxu0 0.0
    %1194 = vmatprep.subr.mxu0 0.0
    %1195 = vmatpush1.msra.mxu0 0.0
    %1196 = vmatprep.subr.mxu0 0.0
    %1197 = vmatpush1.msra.mxu0 0.0
    %1198 = vmatprep.subr.mxu0 0.0
    %1199 = vmatpush1.msra.mxu0 0.0
    %1200 = vmatprep.subr.mxu0 0.0
    %1201 = vmatpush1.msra.mxu0 0.0
    %1202 = vmatprep.subr.mxu0 0.0
    %1203 = vmatpush1.msra.mxu0 0.0
    %1204 = vmatprep.subr.mxu0 0.0
    %1205 = vmatpush1.msra.mxu0 0.0
    %1206 = vmatprep.subr.mxu0 0.0
    %1207 = vmatpush1.msra.mxu0 0.0
    %1208 = vmatprep.subr.mxu0 0.0
    %1209 = vmatpush1.msra.mxu0 0.0
    %1210 = vmatprep.subr.mxu0 0.0
    %1211 = vmatpush1.msra.mxu0 0.0
    %1212 = vmatprep.subr.mxu0 0.0
    %1213 = vmatpush1.msra.mxu0 0.0
    %1214 = vmatprep.subr.mxu0 0.0
    %1215 = vmatpush1.msra.mxu0 %v71
    %1216 = vmatprep.subr.mxu0 0.0
    %1217 = vmatpush1.msra.mxu0 %v70
    %1218 = vmatprep.subr.mxu0 0.0
    %1219 = vmatpush1.msra.mxu0 %v69
    %1220 = vmatprep.subr.mxu0 0.0
    %1221 = vmatpush1.msra.mxu0 %v68
    %1222 = vmatprep.subr.mxu0 0.0
    %1223 = vmatpush2.msra.mxu0 0.0
    %1224 = vmatprep.subr.mxu0 0.0
    %1225 = vmatpush2.msra.mxu0 0.0
    %1226 = vmatprep.subr.mxu0 0.0
    %1227 = vmatpush2.msra.mxu0 0.0
    %1228 = vmatprep.subr.mxu0 0.0
    %1229 = vmatpush2.msra.mxu0 0.0
    %1230 = vmatprep.subr.mxu0 0.0
    %1231 = vmatpush2.msra.mxu0 0.0
    %1232 = vmatprep.subr.mxu0 0.0
    %1233 = vmatpush2.msra.mxu0 0.0
    %1234 = vmatprep.subr.mxu0 0.0
    %1235 = vmatpush2.msra.mxu0 0.0
    %1236 = vmatprep.subr.mxu0 0.0
    %1237 = vmatpush2.msra.mxu0 0.0
    %1238 = vmatprep.subr.mxu0 0.0
    %1239 = vmatpush2.msra.mxu0 0.0
    %1240 = vmatprep.subr.mxu0 0.0
    %1241 = vmatpush2.msra.mxu0 0.0
    %1242 = vmatprep.subr.mxu0 0.0
    %1243 = vmatpush2.msra.mxu0 0.0
    %1244 = vmatprep.subr.mxu0 0.0
    %1245 = vmatpush2.msra.mxu0 0.0
    %1246 = vmatprep.subr.mxu0 0.0
    %1247 = vmatpush2.msra.mxu0 0.0
    %1248 = vmatprep.subr.mxu0 0.0
    %1249 = vmatpush2.msra.mxu0 0.0
    %1250 = vmatprep.subr.mxu0 0.0
    %1251 = vmatpush2.msra.mxu0 0.0
    %1252 = vmatprep.subr.mxu0 0.0
    %1253 = vmatpush2.msra.mxu0 0.0
    %1254 = vmatprep.mubr.f32.mxu0 0.0
    %1255 = vmatmul.mubr.f32.gmra.mxu0 %v1185
    %v1256 = vpop.f32.mrf.mxu0
    %v1257 = vadd.f32 %v1182, %v1256
    %v1258 = vpop.f32.mrf.mxu0
    %1259 = vmatprep.mubr.f32.mxu0 0.0
    %1260 = vmatmul.mubr.f32.gmra.mxu0 %v1188
    %v1261 = vpop.f32.mrf.mxu0
    %v1262 = vadd.f32 %v1182, %v1261
    %v1263 = vpop.f32.mrf.mxu0
    %1264 = vdwg.mxu0
    %v1265 = vmax.f32 %v1257, 0.0
    %v1266 = vmax.f32 %v1262, 0.0
    %1267 = vrot.lane.b32.xlu0 %v1141, 96
    %v1268 = vpop.permute.xlu0 %1267
    %vm1270 = vcmask 523264
    %v1272 = vsel %vm1270, %v1265, 0
    %v1275 = vsel %vm1270, %v1266, 0
    %1277 = vmatprep.subr.mxu0 0.0
    %1278 = vmatpush1.msra.mxu0 0.0
    %1279 = vmatprep.subr.mxu0 0.0
    %1280 = vmatpush1.msra.mxu0 0.0
    %1281 = vmatprep.subr.mxu0 0.0
    %1282 = vmatpush1.msra.mxu0 0.0
    %1283 = vmatprep.subr.mxu0 0.0
    %1284 = vmatpush1.msra.mxu0 0.0
    %1285 = vmatprep.subr.mxu0 0.0
    %1286 = vmatpush1.msra.mxu0 0.0
    %1287 = vmatprep.subr.mxu0 0.0
    %1288 = vmatpush1.msra.mxu0 0.0
    %1289 = vmatprep.subr.mxu0 0.0
    %1290 = vmatpush1.msra.mxu0 0.0
    %1291 = vmatprep.subr.mxu0 0.0
    %1292 = vmatpush1.msra.mxu0 0.0
    %1293 = vmatprep.subr.mxu0 0.0
    %1294 = vmatpush1.msra.mxu0 %v67
    %1295 = vmatprep.subr.mxu0 0.0
    %1296 = vmatpush1.msra.mxu0 %v66
    %1297 = vmatprep.subr.mxu0 0.0
    %1298 = vmatpush1.msra.mxu0 %v65
    %1299 = vmatprep.subr.mxu0 0.0
    %1300 = vmatpush1.msra.mxu0 %v64
    %1301 = vmatprep.subr.mxu0 0.0
    %1302 = vmatpush1.msra.mxu0 %v63
    %1303 = vmatprep.subr.mxu0 0.0
    %1304 = vmatpush1.msra.mxu0 %v62
    %1305 = vmatprep.subr.mxu0 0.0
    %1306 = vmatpush1.msra.mxu0 %v61
    %1307 = vmatprep.subr.mxu0 0.0
    %1308 = vmatpush1.msra.mxu0 %v60
    %1309 = vmatprep.subr.mxu0 0.0
    %1310 = vmatpush2.msra.mxu0 0.0
    %1311 = vmatprep.subr.mxu0 0.0
    %1312 = vmatpush2.msra.mxu0 0.0
    %1313 = vmatprep.subr.mxu0 0.0
    %1314 = vmatpush2.msra.mxu0 0.0
    %1315 = vmatprep.subr.mxu0 0.0
    %1316 = vmatpush2.msra.mxu0 0.0
    %1317 = vmatprep.subr.mxu0 0.0
    %1318 = vmatpush2.msra.mxu0 0.0
    %1319 = vmatprep.subr.mxu0 0.0
    %1320 = vmatpush2.msra.mxu0 0.0
    %1321 = vmatprep.subr.mxu0 0.0
    %1322 = vmatpush2.msra.mxu0 0.0
    %1323 = vmatprep.subr.mxu0 0.0
    %1324 = vmatpush2.msra.mxu0 0.0
    %1325 = vmatprep.subr.mxu0 0.0
    %1326 = vmatpush2.msra.mxu0 0.0
    %1327 = vmatprep.subr.mxu0 0.0
    %1328 = vmatpush2.msra.mxu0 0.0
    %1329 = vmatprep.subr.mxu0 0.0
    %1330 = vmatpush2.msra.mxu0 0.0
    %1331 = vmatprep.subr.mxu0 0.0
    %1332 = vmatpush2.msra.mxu0 0.0
    %1333 = vmatprep.subr.mxu0 0.0
    %1334 = vmatpush2.msra.mxu0 0.0
    %1335 = vmatprep.subr.mxu0 0.0
    %1336 = vmatpush2.msra.mxu0 0.0
    %1337 = vmatprep.subr.mxu0 0.0
    %1338 = vmatpush2.msra.mxu0 0.0
    %1339 = vmatprep.subr.mxu0 0.0
    %1340 = vmatpush2.msra.mxu0 0.0
    %1341 = vmatprep.mubr.f32.mxu0 0.0
    %1342 = vmatmul.mubr.f32.gmra.mxu0 %v1272
    %v1343 = vpop.f32.mrf.mxu0
    %v1344 = vadd.f32 %v1268, %v1343
    %v1345 = vpop.f32.mrf.mxu0
    %1346 = vmatprep.mubr.f32.mxu0 0.0
    %1347 = vmatmul.mubr.f32.gmra.mxu0 %v1275
    %v1348 = vpop.f32.mrf.mxu0
    %v1349 = vadd.f32 %v1268, %v1348
    %v1350 = vpop.f32.mrf.mxu0
    %1351 = vdwg.mxu0
    %v1352 = vadd.f32 %v1142, %v1344
    %v1353 = vadd.f32 %v1143, %v1349
    %1354 = vst.msk [vmem:[#allocation8] sm:$0xff] %vm79, %v1352
    %1355 = vst.msk [vmem:[#allocation8 + $0x8] sm:$0xff] %vm79, %v1353
    // Predicated region
    $region26: #{tpu_custom_call.1} parent=1 // pred_check
      _
    $region27: #{tpu_custom_call.1} parent=1 // pred_check_branch
      %1357 = sbr.rel (0) target = $region29
    $region28: #{tpu_custom_call.1} parent=1 // pred_region
      %s1359 = ssub.s32 256, 256
      %1360 = vsyncadd [#allocation4], %s1359
      %s1361 = sshll.u32 [#allocation8], 4
      %s1362 = int_to_ptr.vmem [resolvable:$true] %s1361
      %1367 = dma.vmem_to_hbm [thread:$0]  %s1362, 256, %s3, [#allocation4], 128, 128, 8
    $region29: #{tpu_custom_call.1} parent=1 // pred_fallthru
      _
    // Predicated region
    $region30: #{tpu_custom_call.1} parent=1 // pred_check
      _
    $region31: #{tpu_custom_call.1} parent=1 // pred_check_branch
      %1369 = sbr.rel (0) target = $region33
    $region32: #{tpu_custom_call.1} parent=1 // pred_region
      %1370 = dma.done [#allocation4], 256
    $region33: #{tpu_custom_call.1} parent=1 // pred_fallthru
      _
    %1371 = vsyncpa [#allocation3], 1
    %1372 = vsyncpa [#allocation6], 1
    %1373 = vsyncpa [#allocation4], 1

</llo_original>
